<compile_context>
chip_gen: v5e
topology: v5e:2x2
jax: 0.10.0
libtpu: 0.0.40
codegen_flags: <defaults>
</compile_context>

<pallas_src>
import functools

import jax
import jax.numpy as jnp
from jax.experimental import pallas as pl
from jax.experimental.pallas import tpu as pltpu


_LANES = 128
_SUBLANES = 8
_MIN_TILE_B = _SUBLANES * _LANES       # 1024: keeps the output block >= (8, 128)
_DEFAULT_TILE_B = 4096                 # multiple of 1024; sweep 4096..8192 per chip
_VMEM_LIMIT_BYTES = 48 * 1024 * 1024   # > v5e's 16 MiB scoped default, < v7x 64 MiB phys


def _round_up(n, m):
    return ((n + m - 1) // m) * m


def _cdiv(a, b):
    return (a + b - 1) // b


def _mlp_kernel(x_ref, w1_ref, b1_ref, w2_ref, b2_ref, w3r_ref, b3_ref, o_ref):
    # x may be streamed as bf16 (HBM-bound path); all math accumulates in f32.
    x = x_ref[...].astype(jnp.float32)                               # (TILE_B, D)

    h1 = jnp.dot(x, w1_ref[...], preferred_element_type=jnp.float32) + b1_ref[...]
    h1 = jnp.maximum(h1, 0.0)                                        # (TILE_B, 64)

    h2 = jnp.dot(h1, w2_ref[...], preferred_element_type=jnp.float32) + b2_ref[...]
    h2 = jnp.maximum(h2, 0.0)                                        # (TILE_B, 32)

    # Layer 3: out[r] = sum_k h2[r, k] * w3[k] + b3.  An N=1/K=32 matmul wastes an
    # MXU pass, so do it on the VPU (multiply) + XLU (lane reduce).  Produce the
    # result lane-dense: row r maps to (r // 128, r % 128) -> full unmasked vst.
    tile_b = h2.shape[0]
    h2_3d = h2.reshape(tile_b // _LANES, _LANES, h2.shape[-1])       # splits lead dim only
    h3 = jnp.sum(h2_3d * w3r_ref[...], axis=-1)                      # (TILE_B//128, 128)
    o_ref[...] = (h3 + b3_ref[...]).astype(o_ref.dtype)


@functools.partial(jax.jit, static_argnames=("tile_b", "stream_bf16"))
def regression_model_forward(x, w1, b1, w2, b2, w3, b3, *,
                             tile_b=_DEFAULT_TILE_B, stream_bf16=False):
    """x: (B, D) f32; weights stored (in, out); returns (B, 1) f32."""
    B, D = x.shape
    assert tile_b % _MIN_TILE_B == 0, "tile_b must be a multiple of 1024"

    # --- choose the batch tile ------------------------------------------------
    #  * never below 1024 rows (keeps the (eff_tile//128, 128) output block
    #    sublane-aligned and the store path unmasked),
    #  * prefer >= 2 grid steps when there is enough work, so the "parallel"
    #    batch axis actually shards across both v7x TensorCores,
    #  * cap at tile_b (default 4096; sweep upward with the VMEM budget below).
    Bp_min = _round_up(B, _MIN_TILE_B)
    eff_tile = min(tile_b, Bp_min)
    if eff_tile >= Bp_min and Bp_min >= 2 * _MIN_TILE_B:
        eff_tile = _round_up(_cdiv(Bp_min, 2), _MIN_TILE_B)
    Bp = _round_up(B, eff_tile)
    if Bp != B:
        x = jnp.pad(x, ((0, Bp - B), (0, 0)))

    if stream_bf16:
        # Halves the streamed HBM bytes for the only large tensor; ~1e-3 relative
        # error vs the f32 reference (deliberate trade-off, gated behind a flag).
        x = x.astype(jnp.bfloat16)

    w3_row = w3.reshape(1, -1)   # (1, 32): lane-dim row for the VPU multiply
    b3_2d = b3.reshape(1, 1)

    hidden1, hidden2 = w1.shape[1], w2.shape[1]
    x_bytes = (2 if stream_bf16 else 4) * Bp * D
    flops = 2 * Bp * (D * hidden1 + hidden1 * hidden2 + hidden2)
    bytes_accessed = (x_bytes + 4 * (Bp + w1.size + b1.size + w2.size + b2.size
                                     + w3.size + b3.size))

    out2d = pl.pallas_call(
        _mlp_kernel,
        out_shape=jax.ShapeDtypeStruct((Bp // _LANES, _LANES), jnp.float32),
        grid=(Bp // eff_tile,),
        in_specs=[
            # x: streamed per tile.  For v5e, pipeline_mode=pl.Buffered(3) is a
            # cheap sweep if the trace shows exposed input DMA at large tiles.
            pl.BlockSpec((eff_tile, D), lambda i: (i, 0)),
            pl.BlockSpec(w1.shape, lambda i: (0, 0)),        # params: VMEM-resident
            pl.BlockSpec(b1.shape, lambda i: (0, 0)),
            pl.BlockSpec(w2.shape, lambda i: (0, 0)),
            pl.BlockSpec(b2.shape, lambda i: (0, 0)),
            pl.BlockSpec(w3_row.shape, lambda i: (0, 0)),
            pl.BlockSpec(b3_2d.shape, lambda i: (0, 0)),
        ],
        out_specs=pl.BlockSpec((eff_tile // _LANES, _LANES), lambda i: (i, 0)),
        compiler_params=pltpu.CompilerParams(
            dimension_semantics=("parallel",),
            vmem_limit_bytes=_VMEM_LIMIT_BYTES),
        cost_estimate=pl.CostEstimate(
            flops=flops, transcendentals=0, bytes_accessed=bytes_accessed),
    )(x, w1, b1, w2, b2, w3_row, b3_2d)

    # TODO(synk): lane-dense x packing ((Bp,16)->(Bp/8,128)) with a block-diagonal
    # W1 is the remaining structural option if traces still show narrow-row DMA.

    # Undo the lane-dense packing and batch padding.
    return out2d.reshape(Bp, 1)[:B]


def init_linear_params(key, in_dim, out_dim):
    # Mirrors PyTorch nn.Linear default init: U(-1/sqrt(in), 1/sqrt(in)).
    k_w, k_b = jax.random.split(key)
    bound = 1.0 / jnp.sqrt(jnp.float32(in_dim))
    # Stored as (in, out) so the kernel computes x @ W + b (== x @ weight.T + bias).
    w = jax.random.uniform(k_w, (in_dim, out_dim), jnp.float32, -bound, bound)
    b = jax.random.uniform(k_b, (1, out_dim), jnp.float32, -bound, bound)
    return w, b


def reference_forward(x, w1, b1, w2, b2, w3, b3):
    h1 = jnp.maximum(x @ w1 + b1, 0.0)
    h2 = jnp.maximum(h1 @ w2 + b2, 0.0)
    return h2 @ w3 + b3


if __name__ == "__main__":
    key = jax.random.PRNGKey(0)
    k_x, k1, k2, k3, k_x2 = jax.random.split(key, 5)

    input_dim = 16

    w1, b1 = init_linear_params(k1, input_dim, 64)
    w2, b2 = init_linear_params(k2, 64, 32)
    w3, b3 = init_linear_params(k3, 32, 1)

    # Small demo batch: (B, input_dim) -> (B, 1), same semantics as the nn.Module.
    # Pads up to one 1024-row tile; single-step grid with a full-array out block.
    x = jax.random.normal(k_x, (8, input_dim), jnp.float32)
    out = jax.block_until_ready(regression_model_forward(x, w1, b1, w2, b2, w3, b3))
    ref = reference_forward(x, w1, b1, w2, b2, w3, b3)
    assert out.shape == (8, 1), out.shape
    assert jnp.allclose(out, ref, atol=1e-5, rtol=1e-5), "mismatch vs reference (small)"

    # Non-multiple batch: exercises batch padding, the >=2-step grid split
    # (v7x 2-TC friendly), VMEM-resident weights and lane-dense writeback.
    x2 = jax.random.normal(k_x2, (3000, input_dim), jnp.float32)
    out2 = jax.block_until_ready(
        regression_model_forward(x2, w1, b1, w2, b2, w3, b3))
    ref2 = reference_forward(x2, w1, b1, w2, b2, w3, b3)
    assert out2.shape == (3000, 1), out2.shape
    assert jnp.allclose(out2, ref2, atol=1e-5, rtol=1e-5), "mismatch vs reference (tiled)"

    # bf16 streaming path (mem-bound optimization for v6e/v7x): looser tolerance.
    out3 = jax.block_until_ready(
        regression_model_forward(x2, w1, b1, w2, b2, w3, b3, stream_bf16=True))
    assert out3.shape == (3000, 1), out3.shape
    assert jnp.allclose(out3, ref2, atol=5e-2, rtol=5e-2), "mismatch vs reference (bf16)"

    print("KERNEL_OK")
</pallas_src>

<mosaic_0001>
module attributes {stable_mosaic.version = 11 : i64} {
  func.func @_mlp_kernel(%arg0: i32, %arg1: memref<1024x16xf32, #tpu.memory_space<vmem>>, %arg2: memref<16x64xf32, #tpu.memory_space<vmem>>, %arg3: memref<1x64xf32, #tpu.memory_space<vmem>>, %arg4: memref<64x32xf32, #tpu.memory_space<vmem>>, %arg5: memref<1x32xf32, #tpu.memory_space<vmem>>, %arg6: memref<1x32xf32, #tpu.memory_space<vmem>>, %arg7: memref<1x1xf32, #tpu.memory_space<vmem>>, %arg8: memref<8x128xf32, #tpu.memory_space<vmem>>) attributes {dimension_semantics = [#tpu.dimension_semantics<parallel>], iteration_bounds = array<i64: 1>, scalar_prefetch = 0 : i64, scratch_operands = 0 : i64, tpu.core_type = #tpu.core_type<tc>, window_params = [{transform_indices = @transform_0, window_bounds = array<i64: 1024, 16>}, {pipeline_mode = #tpu.pipeline_mode<synchronous>, transform_indices = @transform_1, window_bounds = array<i64: 16, 64>}, {pipeline_mode = #tpu.pipeline_mode<synchronous>, transform_indices = @transform_2, window_bounds = array<i64: 1, 64>}, {pipeline_mode = #tpu.pipeline_mode<synchronous>, transform_indices = @transform_3, window_bounds = array<i64: 64, 32>}, {pipeline_mode = #tpu.pipeline_mode<synchronous>, transform_indices = @transform_4, window_bounds = array<i64: 1, 32>}, {pipeline_mode = #tpu.pipeline_mode<synchronous>, transform_indices = @transform_5, window_bounds = array<i64: 1, 32>}, {pipeline_mode = #tpu.pipeline_mode<synchronous>, transform_indices = @transform_6, window_bounds = array<i64: 1, 1>}, {transform_indices = @transform_7, window_bounds = array<i64: 8, 128>}]} {
    %c0 = arith.constant 0 : index
    %c0_0 = arith.constant 0 : index
    %0 = vector.load %arg1[%c0, %c0_0] : memref<1024x16xf32, #tpu.memory_space<vmem>>, vector<1024x16xf32>
    %c0_1 = arith.constant 0 : index
    %c0_2 = arith.constant 0 : index
    %1 = vector.load %arg2[%c0_1, %c0_2] : memref<16x64xf32, #tpu.memory_space<vmem>>, vector<16x64xf32>
    %cst = arith.constant dense<0.000000e+00> : vector<1024x64xf32>
    %2 = tpu.matmul %0, %1, %cst {dimension_numbers = #tpu.dot_dimension_numbers<[1], [0], [0], [1], [0, 0, 1, 1], [], []>} : vector<1024x16xf32>, vector<16x64xf32>, vector<1024x64xf32> -> vector<1024x64xf32>
    %c0_3 = arith.constant 0 : index
    %c0_4 = arith.constant 0 : index
    %3 = vector.load %arg3[%c0_3, %c0_4] : memref<1x64xf32, #tpu.memory_space<vmem>>, vector<1x64xf32>
    %4 = vector.broadcast %3 : vector<1x64xf32> to vector<1024x64xf32>
    %5 = arith.addf %2, %4 : vector<1024x64xf32>
    %cst_5 = arith.constant 0.000000e+00 : f32
    %6 = vector.broadcast %cst_5 : f32 to vector<1024x64xf32>
    %7 = arith.maximumf %5, %6 : vector<1024x64xf32>
    %c0_6 = arith.constant 0 : index
    %c0_7 = arith.constant 0 : index
    %8 = vector.load %arg4[%c0_6, %c0_7] : memref<64x32xf32, #tpu.memory_space<vmem>>, vector<64x32xf32>
    %cst_8 = arith.constant dense<0.000000e+00> : vector<1024x32xf32>
    %9 = tpu.matmul %7, %8, %cst_8 {dimension_numbers = #tpu.dot_dimension_numbers<[1], [0], [0], [1], [0, 0, 1, 1], [], []>} : vector<1024x64xf32>, vector<64x32xf32>, vector<1024x32xf32> -> vector<1024x32xf32>
    %c0_9 = arith.constant 0 : index
    %c0_10 = arith.constant 0 : index
    %10 = vector.load %arg5[%c0_9, %c0_10] : memref<1x32xf32, #tpu.memory_space<vmem>>, vector<1x32xf32>
    %11 = vector.broadcast %10 : vector<1x32xf32> to vector<1024x32xf32>
    %12 = arith.addf %9, %11 : vector<1024x32xf32>
    %cst_11 = arith.constant 0.000000e+00 : f32
    %13 = vector.broadcast %cst_11 : f32 to vector<1024x32xf32>
    %14 = arith.maximumf %12, %13 : vector<1024x32xf32>
    %15 = vector.shape_cast %14 : vector<1024x32xf32> to vector<8x128x32xf32>
    %c0_12 = arith.constant 0 : index
    %c0_13 = arith.constant 0 : index
    %16 = vector.load %arg6[%c0_12, %c0_13] : memref<1x32xf32, #tpu.memory_space<vmem>>, vector<1x32xf32>
    %17 = vector.shape_cast %16 : vector<1x32xf32> to vector<1x1x32xf32>
    %18 = vector.broadcast %17 : vector<1x1x32xf32> to vector<8x128x32xf32>
    %19 = arith.mulf %15, %18 : vector<8x128x32xf32>
    %cst_14 = arith.constant dense<0.000000e+00> : vector<8x128xf32>
    %20 = vector.multi_reduction <add>, %19, %cst_14 [2] : vector<8x128x32xf32> to vector<8x128xf32>
    %c0_15 = arith.constant 0 : index
    %c0_16 = arith.constant 0 : index
    %21 = vector.load %arg7[%c0_15, %c0_16] : memref<1x1xf32, #tpu.memory_space<vmem>>, vector<1x1xf32>
    %22 = vector.broadcast %21 : vector<1x1xf32> to vector<8x128xf32>
    %23 = arith.addf %20, %22 : vector<8x128xf32>
    %c0_17 = arith.constant 0 : index
    %c0_18 = arith.constant 0 : index
    %24 = vector.load %arg8[%c0_17, %c0_18] : memref<8x128xf32, #tpu.memory_space<vmem>>, vector<8x128xf32>
    tpu.vector_store %arg8[%c0_17, %c0_18], %23 {strides = array<i32>} : memref<8x128xf32, #tpu.memory_space<vmem>>, vector<8x128xf32>,
    return
  }
  func.func @transform_0(%arg0: i32) -> (i32, i32) {
    %c0_i32 = arith.constant 0 : i32
    %c0_i32_0 = arith.constant 0 : i32
    return %arg0, %c0_i32 : i32, i32
  }
  func.func @transform_1(%arg0: i32) -> (i32, i32) {
    %c0_i32 = arith.constant 0 : i32
    %c0_i32_0 = arith.constant 0 : i32
    %c0_i32_1 = arith.constant 0 : i32
    return %c0_i32, %c0_i32_0 : i32, i32
  }
  func.func @transform_2(%arg0: i32) -> (i32, i32) {
    %c0_i32 = arith.constant 0 : i32
    %c0_i32_0 = arith.constant 0 : i32
    %c0_i32_1 = arith.constant 0 : i32
    return %c0_i32, %c0_i32_0 : i32, i32
  }
  func.func @transform_3(%arg0: i32) -> (i32, i32) {
    %c0_i32 = arith.constant 0 : i32
    %c0_i32_0 = arith.constant 0 : i32
    %c0_i32_1 = arith.constant 0 : i32
    return %c0_i32, %c0_i32_0 : i32, i32
  }
  func.func @transform_4(%arg0: i32) -> (i32, i32) {
    %c0_i32 = arith.constant 0 : i32
    %c0_i32_0 = arith.constant 0 : i32
    %c0_i32_1 = arith.constant 0 : i32
    return %c0_i32, %c0_i32_0 : i32, i32
  }
  func.func @transform_5(%arg0: i32) -> (i32, i32) {
    %c0_i32 = arith.constant 0 : i32
    %c0_i32_0 = arith.constant 0 : i32
    %c0_i32_1 = arith.constant 0 : i32
    return %c0_i32, %c0_i32_0 : i32, i32
  }
  func.func @transform_6(%arg0: i32) -> (i32, i32) {
    %c0_i32 = arith.constant 0 : i32
    %c0_i32_0 = arith.constant 0 : i32
    %c0_i32_1 = arith.constant 0 : i32
    return %c0_i32, %c0_i32_0 : i32, i32
  }
  func.func @transform_7(%arg0: i32) -> (i32, i32) {
    %c0_i32 = arith.constant 0 : i32
    %c0_i32_0 = arith.constant 0 : i32
    return %arg0, %c0_i32 : i32, i32
  }
}

</mosaic_0001>

<llo_original>
// kernel: regression_model_forward.1
$region0: #{regression_model_forward.1}
  #allocation0 [shape = 'u32[]', space=smem, size = 0x4, offset = 0x4, fixed_abs, tag = 'smem constant byte address 0x4 - core index']
  #allocation1 [shape = 'u32[72,128]{1,0:T(1,128)}', space=vmem, size = 0x9000, scoped, tag = 'internal scratch']
  #allocation2 [shape = 'f32[1,1]{1,0:T(1,128)S(1)}', space=vmem, size = 0x200, scoped, tag = 'scoped memory for regression_model_forward.1']
  %s0 = inlined_call_operand.vmem [shape: f32[1024,16], index: 0, kind: input, shape index: {}]
  %s1 = inlined_call_operand.vmem [shape: f32[16,64], index: 1, kind: input, shape index: {}]
  %s2 = inlined_call_operand.vmem [shape: f32[1,64], index: 2, kind: input, shape index: {}]
  %s3 = inlined_call_operand.vmem [shape: f32[64,32], index: 3, kind: input, shape index: {}]
  %s4 = inlined_call_operand.vmem [shape: f32[1,32], index: 4, kind: input, shape index: {}]
  %s5 = inlined_call_operand.vmem [shape: f32[1,32], index: 5, kind: input, shape index: {}]
  %s6 = inlined_call_operand.<no memory space> [shape: f32[1,1], index: 6, kind: input, shape index: {}]
  %s7 = inlined_call_operand.vmem [shape: f32[8,128], index: 7, kind: output, shape index: {}]
  %s8 = sld [smem:[#allocation0]]
  $region38: #{regression_model_forward.1} parent=0
    _
  %s10 = ssub.s32 1, %s8
  %s11 = scalar_select 0, %s10, %s8
  %v12 = vstv %s6
  %13 = vst [vmem:[#allocation2] sm:$0x1] %v12
  // Predicated region
  $region2: #{regression_model_forward.1} parent=0 // pred_check
    _
  $region3: #{regression_model_forward.1} parent=0 // pred_check_branch
    %15 = sbr.rel (0) target = $region5
  $region4: #{regression_model_forward.1} parent=0 // pred_region
    _
  $region5: #{regression_model_forward.1} parent=0 // pred_fallthru
    _
  // Predicated region
  $region6: #{regression_model_forward.1} parent=0 // pred_check
    _
  $region7: #{regression_model_forward.1} parent=0 // pred_check_branch
    %17 = sbr.rel (0) target = $region9
  $region8: #{regression_model_forward.1} parent=0 // pred_region
    _
  $region9: #{regression_model_forward.1} parent=0 // pred_fallthru
    _
  // Predicated region
  $region10: #{regression_model_forward.1} parent=0 // pred_check
    _
  $region11: #{regression_model_forward.1} parent=0 // pred_check_branch
    %19 = sbr.rel (0) target = $region13
  $region12: #{regression_model_forward.1} parent=0 // pred_region
    _
  $region13: #{regression_model_forward.1} parent=0 // pred_fallthru
    _
  // Predicated region
  $region14: #{regression_model_forward.1} parent=0 // pred_check
    _
  $region15: #{regression_model_forward.1} parent=0 // pred_check_branch
    %21 = sbr.rel (0) target = $region17
  $region16: #{regression_model_forward.1} parent=0 // pred_region
    _
  $region17: #{regression_model_forward.1} parent=0 // pred_fallthru
    _
  // Predicated region
  $region18: #{regression_model_forward.1} parent=0 // pred_check
    _
  $region19: #{regression_model_forward.1} parent=0 // pred_check_branch
    %23 = sbr.rel (0) target = $region21
  $region20: #{regression_model_forward.1} parent=0 // pred_region
    _
  $region21: #{regression_model_forward.1} parent=0 // pred_fallthru
    _
  // Predicated region
  $region22: #{regression_model_forward.1} parent=0 // pred_check
    _
  $region23: #{regression_model_forward.1} parent=0 // pred_check_branch
    %25 = sbr.rel (0) target = $region25
  $region24: #{regression_model_forward.1} parent=0 // pred_region
    _
  $region25: #{regression_model_forward.1} parent=0 // pred_fallthru
    _
  // Predicated region
  $region26: #{regression_model_forward.1} parent=0 // pred_check
    _
  $region27: #{regression_model_forward.1} parent=0 // pred_check_branch
    %27 = sbr.rel (0) target = $region29
  $region28: #{regression_model_forward.1} parent=0 // pred_region
    _
  $region29: #{regression_model_forward.1} parent=0 // pred_fallthru
    _
  %v28 = vld [vmem:[%s0] sm:$0xff]
  %v29 = vld [vmem:[%s0 + $0x8] sm:$0xff]
  %v30 = vld [vmem:[%s0 + $0x10] sm:$0xff]
  %v31 = vld [vmem:[%s0 + $0x18] sm:$0xff]
  %v32 = vld [vmem:[%s0 + $0x20] sm:$0xff]
  %v33 = vld [vmem:[%s0 + $0x28] sm:$0xff]
  %v34 = vld [vmem:[%s0 + $0x30] sm:$0xff]
  %v35 = vld [vmem:[%s0 + $0x38] sm:$0xff]
  %v36 = vld [vmem:[%s0 + $0x40] sm:$0xff]
  %v37 = vld [vmem:[%s0 + $0x48] sm:$0xff]
  %v38 = vld [vmem:[%s0 + $0x50] sm:$0xff]
  %v39 = vld [vmem:[%s0 + $0x58] sm:$0xff]
  %v40 = vld [vmem:[%s0 + $0x60] sm:$0xff]
  %v41 = vld [vmem:[%s0 + $0x68] sm:$0xff]
  %v42 = vld [vmem:[%s0 + $0x70] sm:$0xff]
  %v43 = vld [vmem:[%s0 + $0x78] sm:$0xff]
  %v44 = vld [vmem:[%s0 + $0x80] sm:$0xff]
  %v45 = vld [vmem:[%s0 + $0x88] sm:$0xff]
  %v46 = vld [vmem:[%s0 + $0x90] sm:$0xff]
  %v47 = vld [vmem:[%s0 + $0x98] sm:$0xff]
  %v48 = vld [vmem:[%s0 + $0xa0] sm:$0xff]
  %v49 = vld [vmem:[%s0 + $0xa8] sm:$0xff]
  %v50 = vld [vmem:[%s0 + $0xb0] sm:$0xff]
  %v51 = vld [vmem:[%s0 + $0xb8] sm:$0xff]
  %v52 = vld [vmem:[%s0 + $0xc0] sm:$0xff]
  %v53 = vld [vmem:[%s0 + $0xc8] sm:$0xff]
  %v54 = vld [vmem:[%s0 + $0xd0] sm:$0xff]
  %v55 = vld [vmem:[%s0 + $0xd8] sm:$0xff]
  %v56 = vld [vmem:[%s0 + $0xe0] sm:$0xff]
  %v57 = vld [vmem:[%s0 + $0xe8] sm:$0xff]
  %v58 = vld [vmem:[%s0 + $0xf0] sm:$0xff]
  %v59 = vld [vmem:[%s0 + $0xf8] sm:$0xff]
  %v60 = vld [vmem:[%s0 + $0x100] sm:$0xff]
  %v61 = vld [vmem:[%s0 + $0x108] sm:$0xff]
  %v62 = vld [vmem:[%s0 + $0x110] sm:$0xff]
  %v63 = vld [vmem:[%s0 + $0x118] sm:$0xff]
  %v64 = vld [vmem:[%s0 + $0x120] sm:$0xff]
  %v65 = vld [vmem:[%s0 + $0x128] sm:$0xff]
  %v66 = vld [vmem:[%s0 + $0x130] sm:$0xff]
  %v67 = vld [vmem:[%s0 + $0x138] sm:$0xff]
  %v68 = vld [vmem:[%s0 + $0x140] sm:$0xff]
  %v69 = vld [vmem:[%s0 + $0x148] sm:$0xff]
  %v70 = vld [vmem:[%s0 + $0x150] sm:$0xff]
  %v71 = vld [vmem:[%s0 + $0x158] sm:$0xff]
  %v72 = vld [vmem:[%s0 + $0x160] sm:$0xff]
  %v73 = vld [vmem:[%s0 + $0x168] sm:$0xff]
  %v74 = vld [vmem:[%s0 + $0x170] sm:$0xff]
  %v75 = vld [vmem:[%s0 + $0x178] sm:$0xff]
  %v76 = vld [vmem:[%s0 + $0x180] sm:$0xff]
  %v77 = vld [vmem:[%s0 + $0x188] sm:$0xff]
  %v78 = vld [vmem:[%s0 + $0x190] sm:$0xff]
  %v79 = vld [vmem:[%s0 + $0x198] sm:$0xff]
  %v80 = vld [vmem:[%s0 + $0x1a0] sm:$0xff]
  %v81 = vld [vmem:[%s0 + $0x1a8] sm:$0xff]
  %v82 = vld [vmem:[%s0 + $0x1b0] sm:$0xff]
  %v83 = vld [vmem:[%s0 + $0x1b8] sm:$0xff]
  %v84 = vld [vmem:[%s0 + $0x1c0] sm:$0xff]
  %v85 = vld [vmem:[%s0 + $0x1c8] sm:$0xff]
  %v86 = vld [vmem:[%s0 + $0x1d0] sm:$0xff]
  %v87 = vld [vmem:[%s0 + $0x1d8] sm:$0xff]
  %v88 = vld [vmem:[%s0 + $0x1e0] sm:$0xff]
  %v89 = vld [vmem:[%s0 + $0x1e8] sm:$0xff]
  %v90 = vld [vmem:[%s0 + $0x1f0] sm:$0xff]
  %v91 = vld [vmem:[%s0 + $0x1f8] sm:$0xff]
  %v92 = vld [vmem:[%s0 + $0x200] sm:$0xff]
  %v93 = vld [vmem:[%s0 + $0x208] sm:$0xff]
  %v94 = vld [vmem:[%s0 + $0x210] sm:$0xff]
  %v95 = vld [vmem:[%s0 + $0x218] sm:$0xff]
  %v96 = vld [vmem:[%s0 + $0x220] sm:$0xff]
  %v97 = vld [vmem:[%s0 + $0x228] sm:$0xff]
  %v98 = vld [vmem:[%s0 + $0x230] sm:$0xff]
  %v99 = vld [vmem:[%s0 + $0x238] sm:$0xff]
  %v100 = vld [vmem:[%s0 + $0x240] sm:$0xff]
  %v101 = vld [vmem:[%s0 + $0x248] sm:$0xff]
  %v102 = vld [vmem:[%s0 + $0x250] sm:$0xff]
  %v103 = vld [vmem:[%s0 + $0x258] sm:$0xff]
  %v104 = vld [vmem:[%s0 + $0x260] sm:$0xff]
  %v105 = vld [vmem:[%s0 + $0x268] sm:$0xff]
  %v106 = vld [vmem:[%s0 + $0x270] sm:$0xff]
  %v107 = vld [vmem:[%s0 + $0x278] sm:$0xff]
  %v108 = vld [vmem:[%s0 + $0x280] sm:$0xff]
  %v109 = vld [vmem:[%s0 + $0x288] sm:$0xff]
  %v110 = vld [vmem:[%s0 + $0x290] sm:$0xff]
  %v111 = vld [vmem:[%s0 + $0x298] sm:$0xff]
  %v112 = vld [vmem:[%s0 + $0x2a0] sm:$0xff]
  %v113 = vld [vmem:[%s0 + $0x2a8] sm:$0xff]
  %v114 = vld [vmem:[%s0 + $0x2b0] sm:$0xff]
  %v115 = vld [vmem:[%s0 + $0x2b8] sm:$0xff]
  %v116 = vld [vmem:[%s0 + $0x2c0] sm:$0xff]
  %v117 = vld [vmem:[%s0 + $0x2c8] sm:$0xff]
  %v118 = vld [vmem:[%s0 + $0x2d0] sm:$0xff]
  %v119 = vld [vmem:[%s0 + $0x2d8] sm:$0xff]
  %v120 = vld [vmem:[%s0 + $0x2e0] sm:$0xff]
  %v121 = vld [vmem:[%s0 + $0x2e8] sm:$0xff]
  %v122 = vld [vmem:[%s0 + $0x2f0] sm:$0xff]
  %v123 = vld [vmem:[%s0 + $0x2f8] sm:$0xff]
  %v124 = vld [vmem:[%s0 + $0x300] sm:$0xff]
  %v125 = vld [vmem:[%s0 + $0x308] sm:$0xff]
  %v126 = vld [vmem:[%s0 + $0x310] sm:$0xff]
  %v127 = vld [vmem:[%s0 + $0x318] sm:$0xff]
  %v128 = vld [vmem:[%s0 + $0x320] sm:$0xff]
  %v129 = vld [vmem:[%s0 + $0x328] sm:$0xff]
  %v130 = vld [vmem:[%s0 + $0x330] sm:$0xff]
  %v131 = vld [vmem:[%s0 + $0x338] sm:$0xff]
  %v132 = vld [vmem:[%s0 + $0x340] sm:$0xff]
  %v133 = vld [vmem:[%s0 + $0x348] sm:$0xff]
  %v134 = vld [vmem:[%s0 + $0x350] sm:$0xff]
  %v135 = vld [vmem:[%s0 + $0x358] sm:$0xff]
  %v136 = vld [vmem:[%s0 + $0x360] sm:$0xff]
  %v137 = vld [vmem:[%s0 + $0x368] sm:$0xff]
  %v138 = vld [vmem:[%s0 + $0x370] sm:$0xff]
  %v139 = vld [vmem:[%s0 + $0x378] sm:$0xff]
  %v140 = vld [vmem:[%s0 + $0x380] sm:$0xff]
  %v141 = vld [vmem:[%s0 + $0x388] sm:$0xff]
  %v142 = vld [vmem:[%s0 + $0x390] sm:$0xff]
  %v143 = vld [vmem:[%s0 + $0x398] sm:$0xff]
  %v144 = vld [vmem:[%s0 + $0x3a0] sm:$0xff]
  %v145 = vld [vmem:[%s0 + $0x3a8] sm:$0xff]
  %v146 = vld [vmem:[%s0 + $0x3b0] sm:$0xff]
  %v147 = vld [vmem:[%s0 + $0x3b8] sm:$0xff]
  %v148 = vld [vmem:[%s0 + $0x3c0] sm:$0xff]
  %v149 = vld [vmem:[%s0 + $0x3c8] sm:$0xff]
  %v150 = vld [vmem:[%s0 + $0x3d0] sm:$0xff]
  %v151 = vld [vmem:[%s0 + $0x3d8] sm:$0xff]
  %v152 = vld [vmem:[%s0 + $0x3e0] sm:$0xff]
  %v153 = vld [vmem:[%s0 + $0x3e8] sm:$0xff]
  %v154 = vld [vmem:[%s0 + $0x3f0] sm:$0xff]
  %v155 = vld [vmem:[%s0 + $0x3f8] sm:$0xff]
  %v156 = vld [vmem:[%s1] sm:$0xff]
  %v157 = vld [vmem:[%s1 + $0x8] sm:$0xff]
  %v158 = vld [vmem:[%s2] sm:$0x1]
  %v160 = vperm.slane %v158, 0
  %vm162 = vcmask 130048
  %v164 = vsel %vm162, %v28, 0
  %v167 = vsel %vm162, %v29, 0
  %v170 = vsel %vm162, %v30, 0
  %v173 = vsel %vm162, %v31, 0
  %v176 = vsel %vm162, %v32, 0
  %v179 = vsel %vm162, %v33, 0
  %v182 = vsel %vm162, %v34, 0
  %v185 = vsel %vm162, %v35, 0
  %v188 = vsel %vm162, %v36, 0
  %v191 = vsel %vm162, %v37, 0
  %v194 = vsel %vm162, %v38, 0
  %v197 = vsel %vm162, %v39, 0
  %v200 = vsel %vm162, %v40, 0
  %v203 = vsel %vm162, %v41, 0
  %v206 = vsel %vm162, %v42, 0
  %v209 = vsel %vm162, %v43, 0
  %v212 = vsel %vm162, %v44, 0
  %v215 = vsel %vm162, %v45, 0
  %v218 = vsel %vm162, %v46, 0
  %v221 = vsel %vm162, %v47, 0
  %v224 = vsel %vm162, %v48, 0
  %v227 = vsel %vm162, %v49, 0
  %v230 = vsel %vm162, %v50, 0
  %v233 = vsel %vm162, %v51, 0
  %v236 = vsel %vm162, %v52, 0
  %v239 = vsel %vm162, %v53, 0
  %v242 = vsel %vm162, %v54, 0
  %v245 = vsel %vm162, %v55, 0
  %v248 = vsel %vm162, %v56, 0
  %v251 = vsel %vm162, %v57, 0
  %v254 = vsel %vm162, %v58, 0
  %v257 = vsel %vm162, %v59, 0
  %v260 = vsel %vm162, %v60, 0
  %v263 = vsel %vm162, %v61, 0
  %v266 = vsel %vm162, %v62, 0
  %v269 = vsel %vm162, %v63, 0
  %v272 = vsel %vm162, %v64, 0
  %v275 = vsel %vm162, %v65, 0
  %v278 = vsel %vm162, %v66, 0
  %v281 = vsel %vm162, %v67, 0
  %v284 = vsel %vm162, %v68, 0
  %v287 = vsel %vm162, %v69, 0
  %v290 = vsel %vm162, %v70, 0
  %v293 = vsel %vm162, %v71, 0
  %v296 = vsel %vm162, %v72, 0
  %v299 = vsel %vm162, %v73, 0
  %v302 = vsel %vm162, %v74, 0
  %v305 = vsel %vm162, %v75, 0
  %v308 = vsel %vm162, %v76, 0
  %v311 = vsel %vm162, %v77, 0
  %v314 = vsel %vm162, %v78, 0
  %v317 = vsel %vm162, %v79, 0
  %v320 = vsel %vm162, %v80, 0
  %v323 = vsel %vm162, %v81, 0
  %v326 = vsel %vm162, %v82, 0
  %v329 = vsel %vm162, %v83, 0
  %v332 = vsel %vm162, %v84, 0
  %v335 = vsel %vm162, %v85, 0
  %v338 = vsel %vm162, %v86, 0
  %v341 = vsel %vm162, %v87, 0
  %v344 = vsel %vm162, %v88, 0
  %v347 = vsel %vm162, %v89, 0
  %v350 = vsel %vm162, %v90, 0
  %v353 = vsel %vm162, %v91, 0
  %v356 = vsel %vm162, %v92, 0
  %v359 = vsel %vm162, %v93, 0
  %v362 = vsel %vm162, %v94, 0
  %v365 = vsel %vm162, %v95, 0
  %v368 = vsel %vm162, %v96, 0
  %v371 = vsel %vm162, %v97, 0
  %v374 = vsel %vm162, %v98, 0
  %v377 = vsel %vm162, %v99, 0
  %v380 = vsel %vm162, %v100, 0
  %v383 = vsel %vm162, %v101, 0
  %v386 = vsel %vm162, %v102, 0
  %v389 = vsel %vm162, %v103, 0
  %v392 = vsel %vm162, %v104, 0
  %v395 = vsel %vm162, %v105, 0
  %v398 = vsel %vm162, %v106, 0
  %v401 = vsel %vm162, %v107, 0
  %v404 = vsel %vm162, %v108, 0
  %v407 = vsel %vm162, %v109, 0
  %v410 = vsel %vm162, %v110, 0
  %v413 = vsel %vm162, %v111, 0
  %v416 = vsel %vm162, %v112, 0
  %v419 = vsel %vm162, %v113, 0
  %v422 = vsel %vm162, %v114, 0
  %v425 = vsel %vm162, %v115, 0
  %v428 = vsel %vm162, %v116, 0
  %v431 = vsel %vm162, %v117, 0
  %v434 = vsel %vm162, %v118, 0
  %v437 = vsel %vm162, %v119, 0
  %v440 = vsel %vm162, %v120, 0
  %v443 = vsel %vm162, %v121, 0
  %v446 = vsel %vm162, %v122, 0
  %v449 = vsel %vm162, %v123, 0
  %v452 = vsel %vm162, %v124, 0
  %v455 = vsel %vm162, %v125, 0
  %v458 = vsel %vm162, %v126, 0
  %v461 = vsel %vm162, %v127, 0
  %v464 = vsel %vm162, %v128, 0
  %v467 = vsel %vm162, %v129, 0
  %v470 = vsel %vm162, %v130, 0
  %v473 = vsel %vm162, %v131, 0
  %v476 = vsel %vm162, %v132, 0
  %v479 = vsel %vm162, %v133, 0
  %v482 = vsel %vm162, %v134, 0
  %v485 = vsel %vm162, %v135, 0
  %v488 = vsel %vm162, %v136, 0
  %v491 = vsel %vm162, %v137, 0
  %v494 = vsel %vm162, %v138, 0
  %v497 = vsel %vm162, %v139, 0
  %v500 = vsel %vm162, %v140, 0
  %v503 = vsel %vm162, %v141, 0
  %v506 = vsel %vm162, %v142, 0
  %v509 = vsel %vm162, %v143, 0
  %v512 = vsel %vm162, %v144, 0
  %v515 = vsel %vm162, %v145, 0
  %v518 = vsel %vm162, %v146, 0
  %v521 = vsel %vm162, %v147, 0
  %v524 = vsel %vm162, %v148, 0
  %v527 = vsel %vm162, %v149, 0
  %v530 = vsel %vm162, %v150, 0
  %v533 = vsel %vm162, %v151, 0
  %v536 = vsel %vm162, %v152, 0
  %v539 = vsel %vm162, %v153, 0
  %v542 = vsel %vm162, %v154, 0
  %v545 = vsel %vm162, %v155, 0
  %547 = vmatpush.msra.mxu0 0.0
  %548 = vmatpush.msra.mxu0 0.0
  %549 = vmatpush.msra.mxu0 0.0
  %550 = vmatpush.msra.mxu0 0.0
  %551 = vmatpush.msra.mxu0 0.0
  %552 = vmatpush.msra.mxu0 0.0
  %553 = vmatpush.msra.mxu0 0.0
  %554 = vmatpush.msra.mxu0 0.0
  %555 = vmatpush.msra.mxu0 0.0
  %556 = vmatpush.msra.mxu0 0.0
  %557 = vmatpush.msra.mxu0 0.0
  %558 = vmatpush.msra.mxu0 0.0
  %559 = vmatpush.msra.mxu0 0.0
  %560 = vmatpush.msra.mxu0 0.0
  %561 = vmatpush.msra.mxu0 %v157
  %562 = vmatpush.msra.mxu0 %v156
  %563 = vmatmul.f32.gmra.mxu0 %v164
  %v564 = vpop.f32.mrf.mxu0
  %v565 = vadd.f32 %v160, %v564
  %566 = vmatmul.f32.gmra.mxu0 %v167
  %v567 = vpop.f32.mrf.mxu0
  %v568 = vadd.f32 %v160, %v567
  %569 = vmatmul.f32.gmra.mxu0 %v170
  %v570 = vpop.f32.mrf.mxu0
  %v571 = vadd.f32 %v160, %v570
  %572 = vmatmul.f32.gmra.mxu0 %v173
  %v573 = vpop.f32.mrf.mxu0
  %v574 = vadd.f32 %v160, %v573
  %575 = vmatmul.f32.gmra.mxu0 %v176
  %v576 = vpop.f32.mrf.mxu0
  %v577 = vadd.f32 %v160, %v576
  %578 = vmatmul.f32.gmra.mxu0 %v179
  %v579 = vpop.f32.mrf.mxu0
  %v580 = vadd.f32 %v160, %v579
  %581 = vmatmul.f32.gmra.mxu0 %v182
  %v582 = vpop.f32.mrf.mxu0
  %v583 = vadd.f32 %v160, %v582
  %584 = vmatmul.f32.gmra.mxu0 %v185
  %v585 = vpop.f32.mrf.mxu0
  %v586 = vadd.f32 %v160, %v585
  %587 = vmatmul.f32.gmra.mxu0 %v188
  %v588 = vpop.f32.mrf.mxu0
  %v589 = vadd.f32 %v160, %v588
  %590 = vmatmul.f32.gmra.mxu0 %v191
  %v591 = vpop.f32.mrf.mxu0
  %v592 = vadd.f32 %v160, %v591
  %593 = vmatmul.f32.gmra.mxu0 %v194
  %v594 = vpop.f32.mrf.mxu0
  %v595 = vadd.f32 %v160, %v594
  %596 = vmatmul.f32.gmra.mxu0 %v197
  %v597 = vpop.f32.mrf.mxu0
  %v598 = vadd.f32 %v160, %v597
  %599 = vmatmul.f32.gmra.mxu0 %v200
  %v600 = vpop.f32.mrf.mxu0
  %v601 = vadd.f32 %v160, %v600
  %602 = vmatmul.f32.gmra.mxu0 %v203
  %v603 = vpop.f32.mrf.mxu0
  %v604 = vadd.f32 %v160, %v603
  %605 = vmatmul.f32.gmra.mxu0 %v206
  %v606 = vpop.f32.mrf.mxu0
  %v607 = vadd.f32 %v160, %v606
  %608 = vmatmul.f32.gmra.mxu0 %v209
  %v609 = vpop.f32.mrf.mxu0
  %v610 = vadd.f32 %v160, %v609
  %611 = vmatmul.f32.gmra.mxu0 %v212
  %v612 = vpop.f32.mrf.mxu0
  %v613 = vadd.f32 %v160, %v612
  %614 = vmatmul.f32.gmra.mxu0 %v215
  %v615 = vpop.f32.mrf.mxu0
  %v616 = vadd.f32 %v160, %v615
  %617 = vmatmul.f32.gmra.mxu0 %v218
  %v618 = vpop.f32.mrf.mxu0
  %v619 = vadd.f32 %v160, %v618
  %620 = vmatmul.f32.gmra.mxu0 %v221
  %v621 = vpop.f32.mrf.mxu0
  %v622 = vadd.f32 %v160, %v621
  %623 = vmatmul.f32.gmra.mxu0 %v224
  %v624 = vpop.f32.mrf.mxu0
  %v625 = vadd.f32 %v160, %v624
  %626 = vmatmul.f32.gmra.mxu0 %v227
  %v627 = vpop.f32.mrf.mxu0
  %v628 = vadd.f32 %v160, %v627
  %629 = vmatmul.f32.gmra.mxu0 %v230
  %v630 = vpop.f32.mrf.mxu0
  %v631 = vadd.f32 %v160, %v630
  %632 = vmatmul.f32.gmra.mxu0 %v233
  %v633 = vpop.f32.mrf.mxu0
  %v634 = vadd.f32 %v160, %v633
  %635 = vmatmul.f32.gmra.mxu0 %v236
  %v636 = vpop.f32.mrf.mxu0
  %v637 = vadd.f32 %v160, %v636
  %638 = vmatmul.f32.gmra.mxu0 %v239
  %v639 = vpop.f32.mrf.mxu0
  %v640 = vadd.f32 %v160, %v639
  %641 = vmatmul.f32.gmra.mxu0 %v242
  %v642 = vpop.f32.mrf.mxu0
  %v643 = vadd.f32 %v160, %v642
  %644 = vmatmul.f32.gmra.mxu0 %v245
  %v645 = vpop.f32.mrf.mxu0
  %v646 = vadd.f32 %v160, %v645
  %647 = vmatmul.f32.gmra.mxu0 %v248
  %v648 = vpop.f32.mrf.mxu0
  %v649 = vadd.f32 %v160, %v648
  %650 = vmatmul.f32.gmra.mxu0 %v251
  %v651 = vpop.f32.mrf.mxu0
  %v652 = vadd.f32 %v160, %v651
  %653 = vmatmul.f32.gmra.mxu0 %v254
  %v654 = vpop.f32.mrf.mxu0
  %v655 = vadd.f32 %v160, %v654
  %656 = vmatmul.f32.gmra.mxu0 %v257
  %v657 = vpop.f32.mrf.mxu0
  %v658 = vadd.f32 %v160, %v657
  %659 = vmatmul.f32.gmra.mxu0 %v260
  %v660 = vpop.f32.mrf.mxu0
  %v661 = vadd.f32 %v160, %v660
  %662 = vmatmul.f32.gmra.mxu0 %v263
  %v663 = vpop.f32.mrf.mxu0
  %v664 = vadd.f32 %v160, %v663
  %665 = vmatmul.f32.gmra.mxu0 %v266
  %v666 = vpop.f32.mrf.mxu0
  %v667 = vadd.f32 %v160, %v666
  %668 = vmatmul.f32.gmra.mxu0 %v269
  %v669 = vpop.f32.mrf.mxu0
  %v670 = vadd.f32 %v160, %v669
  %671 = vmatmul.f32.gmra.mxu0 %v272
  %v672 = vpop.f32.mrf.mxu0
  %v673 = vadd.f32 %v160, %v672
  %674 = vmatmul.f32.gmra.mxu0 %v275
  %v675 = vpop.f32.mrf.mxu0
  %v676 = vadd.f32 %v160, %v675
  %677 = vmatmul.f32.gmra.mxu0 %v278
  %v678 = vpop.f32.mrf.mxu0
  %v679 = vadd.f32 %v160, %v678
  %680 = vmatmul.f32.gmra.mxu0 %v281
  %v681 = vpop.f32.mrf.mxu0
  %v682 = vadd.f32 %v160, %v681
  %683 = vmatmul.f32.gmra.mxu0 %v284
  %v684 = vpop.f32.mrf.mxu0
  %v685 = vadd.f32 %v160, %v684
  %686 = vmatmul.f32.gmra.mxu0 %v287
  %v687 = vpop.f32.mrf.mxu0
  %v688 = vadd.f32 %v160, %v687
  %689 = vmatmul.f32.gmra.mxu0 %v290
  %v690 = vpop.f32.mrf.mxu0
  %v691 = vadd.f32 %v160, %v690
  %692 = vmatmul.f32.gmra.mxu0 %v293
  %v693 = vpop.f32.mrf.mxu0
  %v694 = vadd.f32 %v160, %v693
  %695 = vmatmul.f32.gmra.mxu0 %v296
  %v696 = vpop.f32.mrf.mxu0
  %v697 = vadd.f32 %v160, %v696
  %698 = vmatmul.f32.gmra.mxu0 %v299
  %v699 = vpop.f32.mrf.mxu0
  %v700 = vadd.f32 %v160, %v699
  %701 = vmatmul.f32.gmra.mxu0 %v302
  %v702 = vpop.f32.mrf.mxu0
  %v703 = vadd.f32 %v160, %v702
  %704 = vmatmul.f32.gmra.mxu0 %v305
  %v705 = vpop.f32.mrf.mxu0
  %v706 = vadd.f32 %v160, %v705
  %707 = vmatmul.f32.gmra.mxu0 %v308
  %v708 = vpop.f32.mrf.mxu0
  %v709 = vadd.f32 %v160, %v708
  %710 = vmatmul.f32.gmra.mxu0 %v311
  %v711 = vpop.f32.mrf.mxu0
  %v712 = vadd.f32 %v160, %v711
  %713 = vmatmul.f32.gmra.mxu0 %v314
  %v714 = vpop.f32.mrf.mxu0
  %v715 = vadd.f32 %v160, %v714
  %716 = vmatmul.f32.gmra.mxu0 %v317
  %v717 = vpop.f32.mrf.mxu0
  %v718 = vadd.f32 %v160, %v717
  %719 = vmatmul.f32.gmra.mxu0 %v320
  %v720 = vpop.f32.mrf.mxu0
  %v721 = vadd.f32 %v160, %v720
  %722 = vmatmul.f32.gmra.mxu0 %v323
  %v723 = vpop.f32.mrf.mxu0
  %v724 = vadd.f32 %v160, %v723
  %725 = vmatmul.f32.gmra.mxu0 %v326
  %v726 = vpop.f32.mrf.mxu0
  %v727 = vadd.f32 %v160, %v726
  %728 = vmatmul.f32.gmra.mxu0 %v329
  %v729 = vpop.f32.mrf.mxu0
  %v730 = vadd.f32 %v160, %v729
  %731 = vmatmul.f32.gmra.mxu0 %v332
  %v732 = vpop.f32.mrf.mxu0
  %v733 = vadd.f32 %v160, %v732
  %734 = vmatmul.f32.gmra.mxu0 %v335
  %v735 = vpop.f32.mrf.mxu0
  %v736 = vadd.f32 %v160, %v735
  %737 = vmatmul.f32.gmra.mxu0 %v338
  %v738 = vpop.f32.mrf.mxu0
  %v739 = vadd.f32 %v160, %v738
  %740 = vmatmul.f32.gmra.mxu0 %v341
  %v741 = vpop.f32.mrf.mxu0
  %v742 = vadd.f32 %v160, %v741
  %743 = vmatmul.f32.gmra.mxu0 %v344
  %v744 = vpop.f32.mrf.mxu0
  %v745 = vadd.f32 %v160, %v744
  %746 = vmatmul.f32.gmra.mxu0 %v347
  %v747 = vpop.f32.mrf.mxu0
  %v748 = vadd.f32 %v160, %v747
  %749 = vmatmul.f32.gmra.mxu0 %v350
  %v750 = vpop.f32.mrf.mxu0
  %v751 = vadd.f32 %v160, %v750
  %752 = vmatmul.f32.gmra.mxu0 %v353
  %v753 = vpop.f32.mrf.mxu0
  %v754 = vadd.f32 %v160, %v753
  %755 = vmatmul.f32.gmra.mxu0 %v356
  %v756 = vpop.f32.mrf.mxu0
  %v757 = vadd.f32 %v160, %v756
  %758 = vmatmul.f32.gmra.mxu0 %v359
  %v759 = vpop.f32.mrf.mxu0
  %v760 = vadd.f32 %v160, %v759
  %761 = vmatmul.f32.gmra.mxu0 %v362
  %v762 = vpop.f32.mrf.mxu0
  %v763 = vadd.f32 %v160, %v762
  %764 = vmatmul.f32.gmra.mxu0 %v365
  %v765 = vpop.f32.mrf.mxu0
  %v766 = vadd.f32 %v160, %v765
  %767 = vmatmul.f32.gmra.mxu0 %v368
  %v768 = vpop.f32.mrf.mxu0
  %v769 = vadd.f32 %v160, %v768
  %770 = vmatmul.f32.gmra.mxu0 %v371
  %v771 = vpop.f32.mrf.mxu0
  %v772 = vadd.f32 %v160, %v771
  %773 = vmatmul.f32.gmra.mxu0 %v374
  %v774 = vpop.f32.mrf.mxu0
  %v775 = vadd.f32 %v160, %v774
  %776 = vmatmul.f32.gmra.mxu0 %v377
  %v777 = vpop.f32.mrf.mxu0
  %v778 = vadd.f32 %v160, %v777
  %779 = vmatmul.f32.gmra.mxu0 %v380
  %v780 = vpop.f32.mrf.mxu0
  %v781 = vadd.f32 %v160, %v780
  %782 = vmatmul.f32.gmra.mxu0 %v383
  %v783 = vpop.f32.mrf.mxu0
  %v784 = vadd.f32 %v160, %v783
  %785 = vmatmul.f32.gmra.mxu0 %v386
  %v786 = vpop.f32.mrf.mxu0
  %v787 = vadd.f32 %v160, %v786
  %788 = vmatmul.f32.gmra.mxu0 %v389
  %v789 = vpop.f32.mrf.mxu0
  %v790 = vadd.f32 %v160, %v789
  %791 = vmatmul.f32.gmra.mxu0 %v392
  %v792 = vpop.f32.mrf.mxu0
  %v793 = vadd.f32 %v160, %v792
  %794 = vmatmul.f32.gmra.mxu0 %v395
  %v795 = vpop.f32.mrf.mxu0
  %v796 = vadd.f32 %v160, %v795
  %797 = vmatmul.f32.gmra.mxu0 %v398
  %v798 = vpop.f32.mrf.mxu0
  %v799 = vadd.f32 %v160, %v798
  %800 = vmatmul.f32.gmra.mxu0 %v401
  %v801 = vpop.f32.mrf.mxu0
  %v802 = vadd.f32 %v160, %v801
  %803 = vmatmul.f32.gmra.mxu0 %v404
  %v804 = vpop.f32.mrf.mxu0
  %v805 = vadd.f32 %v160, %v804
  %806 = vmatmul.f32.gmra.mxu0 %v407
  %v807 = vpop.f32.mrf.mxu0
  %v808 = vadd.f32 %v160, %v807
  %809 = vmatmul.f32.gmra.mxu0 %v410
  %v810 = vpop.f32.mrf.mxu0
  %v811 = vadd.f32 %v160, %v810
  %812 = vmatmul.f32.gmra.mxu0 %v413
  %v813 = vpop.f32.mrf.mxu0
  %v814 = vadd.f32 %v160, %v813
  %815 = vmatmul.f32.gmra.mxu0 %v416
  %v816 = vpop.f32.mrf.mxu0
  %v817 = vadd.f32 %v160, %v816
  %818 = vmatmul.f32.gmra.mxu0 %v419
  %v819 = vpop.f32.mrf.mxu0
  %v820 = vadd.f32 %v160, %v819
  %821 = vmatmul.f32.gmra.mxu0 %v422
  %v822 = vpop.f32.mrf.mxu0
  %v823 = vadd.f32 %v160, %v822
  %824 = vmatmul.f32.gmra.mxu0 %v425
  %v825 = vpop.f32.mrf.mxu0
  %v826 = vadd.f32 %v160, %v825
  %827 = vmatmul.f32.gmra.mxu0 %v428
  %v828 = vpop.f32.mrf.mxu0
  %v829 = vadd.f32 %v160, %v828
  %830 = vmatmul.f32.gmra.mxu0 %v431
  %v831 = vpop.f32.mrf.mxu0
  %v832 = vadd.f32 %v160, %v831
  %833 = vmatmul.f32.gmra.mxu0 %v434
  %v834 = vpop.f32.mrf.mxu0
  %v835 = vadd.f32 %v160, %v834
  %836 = vmatmul.f32.gmra.mxu0 %v437
  %v837 = vpop.f32.mrf.mxu0
  %v838 = vadd.f32 %v160, %v837
  %839 = vmatmul.f32.gmra.mxu0 %v440
  %v840 = vpop.f32.mrf.mxu0
  %v841 = vadd.f32 %v160, %v840
  %842 = vmatmul.f32.gmra.mxu0 %v443
  %v843 = vpop.f32.mrf.mxu0
  %v844 = vadd.f32 %v160, %v843
  %845 = vmatmul.f32.gmra.mxu0 %v446
  %v846 = vpop.f32.mrf.mxu0
  %v847 = vadd.f32 %v160, %v846
  %848 = vmatmul.f32.gmra.mxu0 %v449
  %v849 = vpop.f32.mrf.mxu0
  %v850 = vadd.f32 %v160, %v849
  %851 = vmatmul.f32.gmra.mxu0 %v452
  %v852 = vpop.f32.mrf.mxu0
  %v853 = vadd.f32 %v160, %v852
  %854 = vmatmul.f32.gmra.mxu0 %v455
  %v855 = vpop.f32.mrf.mxu0
  %v856 = vadd.f32 %v160, %v855
  %857 = vmatmul.f32.gmra.mxu0 %v458
  %v858 = vpop.f32.mrf.mxu0
  %v859 = vadd.f32 %v160, %v858
  %860 = vmatmul.f32.gmra.mxu0 %v461
  %v861 = vpop.f32.mrf.mxu0
  %v862 = vadd.f32 %v160, %v861
  %863 = vmatmul.f32.gmra.mxu0 %v464
  %v864 = vpop.f32.mrf.mxu0
  %v865 = vadd.f32 %v160, %v864
  %866 = vmatmul.f32.gmra.mxu0 %v467
  %v867 = vpop.f32.mrf.mxu0
  %v868 = vadd.f32 %v160, %v867
  %869 = vmatmul.f32.gmra.mxu0 %v470
  %v870 = vpop.f32.mrf.mxu0
  %v871 = vadd.f32 %v160, %v870
  %872 = vmatmul.f32.gmra.mxu0 %v473
  %v873 = vpop.f32.mrf.mxu0
  %v874 = vadd.f32 %v160, %v873
  %875 = vmatmul.f32.gmra.mxu0 %v476
  %v876 = vpop.f32.mrf.mxu0
  %v877 = vadd.f32 %v160, %v876
  %878 = vmatmul.f32.gmra.mxu0 %v479
  %v879 = vpop.f32.mrf.mxu0
  %v880 = vadd.f32 %v160, %v879
  %881 = vmatmul.f32.gmra.mxu0 %v482
  %v882 = vpop.f32.mrf.mxu0
  %v883 = vadd.f32 %v160, %v882
  %884 = vmatmul.f32.gmra.mxu0 %v485
  %v885 = vpop.f32.mrf.mxu0
  %v886 = vadd.f32 %v160, %v885
  %887 = vmatmul.f32.gmra.mxu0 %v488
  %v888 = vpop.f32.mrf.mxu0
  %v889 = vadd.f32 %v160, %v888
  %890 = vmatmul.f32.gmra.mxu0 %v491
  %v891 = vpop.f32.mrf.mxu0
  %v892 = vadd.f32 %v160, %v891
  %893 = vmatmul.f32.gmra.mxu0 %v494
  %v894 = vpop.f32.mrf.mxu0
  %v895 = vadd.f32 %v160, %v894
  %896 = vmatmul.f32.gmra.mxu0 %v497
  %v897 = vpop.f32.mrf.mxu0
  %v898 = vadd.f32 %v160, %v897
  %899 = vmatmul.f32.gmra.mxu0 %v500
  %v900 = vpop.f32.mrf.mxu0
  %v901 = vadd.f32 %v160, %v900
  %902 = vmatmul.f32.gmra.mxu0 %v503
  %v903 = vpop.f32.mrf.mxu0
  %v904 = vadd.f32 %v160, %v903
  %905 = vmatmul.f32.gmra.mxu0 %v506
  %v906 = vpop.f32.mrf.mxu0
  %v907 = vadd.f32 %v160, %v906
  %908 = vmatmul.f32.gmra.mxu0 %v509
  %v909 = vpop.f32.mrf.mxu0
  %v910 = vadd.f32 %v160, %v909
  %911 = vmatmul.f32.gmra.mxu0 %v512
  %v912 = vpop.f32.mrf.mxu0
  %v913 = vadd.f32 %v160, %v912
  %914 = vmatmul.f32.gmra.mxu0 %v515
  %v915 = vpop.f32.mrf.mxu0
  %v916 = vadd.f32 %v160, %v915
  %917 = vmatmul.f32.gmra.mxu0 %v518
  %v918 = vpop.f32.mrf.mxu0
  %v919 = vadd.f32 %v160, %v918
  %920 = vmatmul.f32.gmra.mxu0 %v521
  %v921 = vpop.f32.mrf.mxu0
  %v922 = vadd.f32 %v160, %v921
  %923 = vmatmul.f32.gmra.mxu0 %v524
  %v924 = vpop.f32.mrf.mxu0
  %v925 = vadd.f32 %v160, %v924
  %926 = vmatmul.f32.gmra.mxu0 %v527
  %v927 = vpop.f32.mrf.mxu0
  %v928 = vadd.f32 %v160, %v927
  %929 = vmatmul.f32.gmra.mxu0 %v530
  %v930 = vpop.f32.mrf.mxu0
  %v931 = vadd.f32 %v160, %v930
  %932 = vmatmul.f32.gmra.mxu0 %v533
  %v933 = vpop.f32.mrf.mxu0
  %v934 = vadd.f32 %v160, %v933
  %935 = vmatmul.f32.gmra.mxu0 %v536
  %v936 = vpop.f32.mrf.mxu0
  %v937 = vadd.f32 %v160, %v936
  %938 = vmatmul.f32.gmra.mxu0 %v539
  %v939 = vpop.f32.mrf.mxu0
  %v940 = vadd.f32 %v160, %v939
  %941 = vmatmul.f32.gmra.mxu0 %v542
  %v942 = vpop.f32.mrf.mxu0
  %v943 = vadd.f32 %v160, %v942
  %944 = vmatmul.f32.gmra.mxu0 %v545
  %v945 = vpop.f32.mrf.mxu0
  %v946 = vadd.f32 %v160, %v945
  %947 = vdwg.mxu0
  %v948 = vmax.f32 %v565, 0.0
  %v949 = vmax.f32 %v568, 0.0
  %v950 = vmax.f32 %v571, 0.0
  %v951 = vmax.f32 %v574, 0.0
  %v952 = vmax.f32 %v577, 0.0
  %v953 = vmax.f32 %v580, 0.0
  %v954 = vmax.f32 %v583, 0.0
  %v955 = vmax.f32 %v586, 0.0
  %v956 = vmax.f32 %v589, 0.0
  %v957 = vmax.f32 %v592, 0.0
  %v958 = vmax.f32 %v595, 0.0
  %v959 = vmax.f32 %v598, 0.0
  %v960 = vmax.f32 %v601, 0.0
  %v961 = vmax.f32 %v604, 0.0
  %v962 = vmax.f32 %v607, 0.0
  %v963 = vmax.f32 %v610, 0.0
  %v964 = vmax.f32 %v613, 0.0
  %v965 = vmax.f32 %v616, 0.0
  %v966 = vmax.f32 %v619, 0.0
  %v967 = vmax.f32 %v622, 0.0
  %v968 = vmax.f32 %v625, 0.0
  %v969 = vmax.f32 %v628, 0.0
  %v970 = vmax.f32 %v631, 0.0
  %v971 = vmax.f32 %v634, 0.0
  %v972 = vmax.f32 %v637, 0.0
  %v973 = vmax.f32 %v640, 0.0
  %v974 = vmax.f32 %v643, 0.0
  %v975 = vmax.f32 %v646, 0.0
  %v976 = vmax.f32 %v649, 0.0
  %v977 = vmax.f32 %v652, 0.0
  %v978 = vmax.f32 %v655, 0.0
  %v979 = vmax.f32 %v658, 0.0
  %v980 = vmax.f32 %v661, 0.0
  %v981 = vmax.f32 %v664, 0.0
  %v982 = vmax.f32 %v667, 0.0
  %v983 = vmax.f32 %v670, 0.0
  %v984 = vmax.f32 %v673, 0.0
  %v985 = vmax.f32 %v676, 0.0
  %v986 = vmax.f32 %v679, 0.0
  %v987 = vmax.f32 %v682, 0.0
  %v988 = vmax.f32 %v685, 0.0
  %v989 = vmax.f32 %v688, 0.0
  %v990 = vmax.f32 %v691, 0.0
  %v991 = vmax.f32 %v694, 0.0
  %v992 = vmax.f32 %v697, 0.0
  %v993 = vmax.f32 %v700, 0.0
  %v994 = vmax.f32 %v703, 0.0
  %v995 = vmax.f32 %v706, 0.0
  %v996 = vmax.f32 %v709, 0.0
  %v997 = vmax.f32 %v712, 0.0
  %v998 = vmax.f32 %v715, 0.0
  %v999 = vmax.f32 %v718, 0.0
  %v1000 = vmax.f32 %v721, 0.0
  %v1001 = vmax.f32 %v724, 0.0
  %v1002 = vmax.f32 %v727, 0.0
  %v1003 = vmax.f32 %v730, 0.0
  %v1004 = vmax.f32 %v733, 0.0
  %v1005 = vmax.f32 %v736, 0.0
  %v1006 = vmax.f32 %v739, 0.0
  %v1007 = vmax.f32 %v742, 0.0
  %v1008 = vmax.f32 %v745, 0.0
  %v1009 = vmax.f32 %v748, 0.0
  %v1010 = vmax.f32 %v751, 0.0
  %v1011 = vmax.f32 %v754, 0.0
  %v1012 = vmax.f32 %v757, 0.0
  %v1013 = vmax.f32 %v760, 0.0
  %v1014 = vmax.f32 %v763, 0.0
  %v1015 = vmax.f32 %v766, 0.0
  %v1016 = vmax.f32 %v769, 0.0
  %v1017 = vmax.f32 %v772, 0.0
  %v1018 = vmax.f32 %v775, 0.0
  %v1019 = vmax.f32 %v778, 0.0
  %v1020 = vmax.f32 %v781, 0.0
  %v1021 = vmax.f32 %v784, 0.0
  %v1022 = vmax.f32 %v787, 0.0
  %v1023 = vmax.f32 %v790, 0.0
  %v1024 = vmax.f32 %v793, 0.0
  %v1025 = vmax.f32 %v796, 0.0
  %v1026 = vmax.f32 %v799, 0.0
  %v1027 = vmax.f32 %v802, 0.0
  %v1028 = vmax.f32 %v805, 0.0
  %v1029 = vmax.f32 %v808, 0.0
  %v1030 = vmax.f32 %v811, 0.0
  %v1031 = vmax.f32 %v814, 0.0
  %v1032 = vmax.f32 %v817, 0.0
  %v1033 = vmax.f32 %v820, 0.0
  %v1034 = vmax.f32 %v823, 0.0
  %v1035 = vmax.f32 %v826, 0.0
  %v1036 = vmax.f32 %v829, 0.0
  %v1037 = vmax.f32 %v832, 0.0
  %v1038 = vmax.f32 %v835, 0.0
  %v1039 = vmax.f32 %v838, 0.0
  %v1040 = vmax.f32 %v841, 0.0
  %v1041 = vmax.f32 %v844, 0.0
  %v1042 = vmax.f32 %v847, 0.0
  %v1043 = vmax.f32 %v850, 0.0
  %v1044 = vmax.f32 %v853, 0.0
  %v1045 = vmax.f32 %v856, 0.0
  %v1046 = vmax.f32 %v859, 0.0
  %v1047 = vmax.f32 %v862, 0.0
  %v1048 = vmax.f32 %v865, 0.0
  %v1049 = vmax.f32 %v868, 0.0
  %v1050 = vmax.f32 %v871, 0.0
  %v1051 = vmax.f32 %v874, 0.0
  %v1052 = vmax.f32 %v877, 0.0
  %v1053 = vmax.f32 %v880, 0.0
  %v1054 = vmax.f32 %v883, 0.0
  %v1055 = vmax.f32 %v886, 0.0
  %v1056 = vmax.f32 %v889, 0.0
  %v1057 = vmax.f32 %v892, 0.0
  %v1058 = vmax.f32 %v895, 0.0
  %v1059 = vmax.f32 %v898, 0.0
  %v1060 = vmax.f32 %v901, 0.0
  %v1061 = vmax.f32 %v904, 0.0
  %v1062 = vmax.f32 %v907, 0.0
  %v1063 = vmax.f32 %v910, 0.0
  %v1064 = vmax.f32 %v913, 0.0
  %v1065 = vmax.f32 %v916, 0.0
  %v1066 = vmax.f32 %v919, 0.0
  %v1067 = vmax.f32 %v922, 0.0
  %v1068 = vmax.f32 %v925, 0.0
  %v1069 = vmax.f32 %v928, 0.0
  %v1070 = vmax.f32 %v931, 0.0
  %v1071 = vmax.f32 %v934, 0.0
  %v1072 = vmax.f32 %v937, 0.0
  %v1073 = vmax.f32 %v940, 0.0
  %v1074 = vmax.f32 %v943, 0.0
  %v1075 = vmax.f32 %v946, 0.0
  %v1076 = vld [vmem:[%s3] sm:$0xff]
  %v1077 = vld [vmem:[%s3 + $0x8] sm:$0xff]
  %v1078 = vld [vmem:[%s3 + $0x10] sm:$0xff]
  %v1079 = vld [vmem:[%s3 + $0x18] sm:$0xff]
  %v1080 = vld [vmem:[%s3 + $0x20] sm:$0xff]
  %v1081 = vld [vmem:[%s3 + $0x28] sm:$0xff]
  %v1082 = vld [vmem:[%s3 + $0x30] sm:$0xff]
  %v1083 = vld [vmem:[%s3 + $0x38] sm:$0xff]
  %v1084 = vld [vmem:[%s4] sm:$0x1]
  %v1086 = vperm.slane %v1084, 0
  %vm1088 = vcmask 523264
  %v1090 = vsel %vm1088, %v948, 0
  %v1093 = vsel %vm1088, %v949, 0
  %v1096 = vsel %vm1088, %v950, 0
  %v1099 = vsel %vm1088, %v951, 0
  %v1102 = vsel %vm1088, %v952, 0
  %v1105 = vsel %vm1088, %v953, 0
  %v1108 = vsel %vm1088, %v954, 0
  %v1111 = vsel %vm1088, %v955, 0
  %v1114 = vsel %vm1088, %v956, 0
  %v1117 = vsel %vm1088, %v957, 0
  %v1120 = vsel %vm1088, %v958, 0
  %v1123 = vsel %vm1088, %v959, 0
  %v1126 = vsel %vm1088, %v960, 0
  %v1129 = vsel %vm1088, %v961, 0
  %v1132 = vsel %vm1088, %v962, 0
  %v1135 = vsel %vm1088, %v963, 0
  %v1138 = vsel %vm1088, %v964, 0
  %v1141 = vsel %vm1088, %v965, 0
  %v1144 = vsel %vm1088, %v966, 0
  %v1147 = vsel %vm1088, %v967, 0
  %v1150 = vsel %vm1088, %v968, 0
  %v1153 = vsel %vm1088, %v969, 0
  %v1156 = vsel %vm1088, %v970, 0
  %v1159 = vsel %vm1088, %v971, 0
  %v1162 = vsel %vm1088, %v972, 0
  %v1165 = vsel %vm1088, %v973, 0
  %v1168 = vsel %vm1088, %v974, 0
  %v1171 = vsel %vm1088, %v975, 0
  %v1174 = vsel %vm1088, %v976, 0
  %v1177 = vsel %vm1088, %v977, 0
  %v1180 = vsel %vm1088, %v978, 0
  %v1183 = vsel %vm1088, %v979, 0
  %v1186 = vsel %vm1088, %v980, 0
  %v1189 = vsel %vm1088, %v981, 0
  %v1192 = vsel %vm1088, %v982, 0
  %v1195 = vsel %vm1088, %v983, 0
  %v1198 = vsel %vm1088, %v984, 0
  %v1201 = vsel %vm1088, %v985, 0
  %v1204 = vsel %vm1088, %v986, 0
  %v1207 = vsel %vm1088, %v987, 0
  %v1210 = vsel %vm1088, %v988, 0
  %v1213 = vsel %vm1088, %v989, 0
  %v1216 = vsel %vm1088, %v990, 0
  %v1219 = vsel %vm1088, %v991, 0
  %v1222 = vsel %vm1088, %v992, 0
  %v1225 = vsel %vm1088, %v993, 0
  %v1228 = vsel %vm1088, %v994, 0
  %v1231 = vsel %vm1088, %v995, 0
  %v1234 = vsel %vm1088, %v996, 0
  %v1237 = vsel %vm1088, %v997, 0
  %v1240 = vsel %vm1088, %v998, 0
  %v1243 = vsel %vm1088, %v999, 0
  %v1246 = vsel %vm1088, %v1000, 0
  %v1249 = vsel %vm1088, %v1001, 0
  %v1252 = vsel %vm1088, %v1002, 0
  %v1255 = vsel %vm1088, %v1003, 0
  %v1258 = vsel %vm1088, %v1004, 0
  %v1261 = vsel %vm1088, %v1005, 0
  %v1264 = vsel %vm1088, %v1006, 0
  %v1267 = vsel %vm1088, %v1007, 0
  %v1270 = vsel %vm1088, %v1008, 0
  %v1273 = vsel %vm1088, %v1009, 0
  %v1276 = vsel %vm1088, %v1010, 0
  %v1279 = vsel %vm1088, %v1011, 0
  %v1282 = vsel %vm1088, %v1012, 0
  %v1285 = vsel %vm1088, %v1013, 0
  %v1288 = vsel %vm1088, %v1014, 0
  %v1291 = vsel %vm1088, %v1015, 0
  %v1294 = vsel %vm1088, %v1016, 0
  %v1297 = vsel %vm1088, %v1017, 0
  %v1300 = vsel %vm1088, %v1018, 0
  %v1303 = vsel %vm1088, %v1019, 0
  %v1306 = vsel %vm1088, %v1020, 0
  %v1309 = vsel %vm1088, %v1021, 0
  %v1312 = vsel %vm1088, %v1022, 0
  %v1315 = vsel %vm1088, %v1023, 0
  %v1318 = vsel %vm1088, %v1024, 0
  %v1321 = vsel %vm1088, %v1025, 0
  %v1324 = vsel %vm1088, %v1026, 0
  %v1327 = vsel %vm1088, %v1027, 0
  %v1330 = vsel %vm1088, %v1028, 0
  %v1333 = vsel %vm1088, %v1029, 0
  %v1336 = vsel %vm1088, %v1030, 0
  %v1339 = vsel %vm1088, %v1031, 0
  %v1342 = vsel %vm1088, %v1032, 0
  %v1345 = vsel %vm1088, %v1033, 0
  %v1348 = vsel %vm1088, %v1034, 0
  %v1351 = vsel %vm1088, %v1035, 0
  %v1354 = vsel %vm1088, %v1036, 0
  %v1357 = vsel %vm1088, %v1037, 0
  %v1360 = vsel %vm1088, %v1038, 0
  %v1363 = vsel %vm1088, %v1039, 0
  %v1366 = vsel %vm1088, %v1040, 0
  %v1369 = vsel %vm1088, %v1041, 0
  %v1372 = vsel %vm1088, %v1042, 0
  %v1375 = vsel %vm1088, %v1043, 0
  %v1378 = vsel %vm1088, %v1044, 0
  %v1381 = vsel %vm1088, %v1045, 0
  %v1384 = vsel %vm1088, %v1046, 0
  %v1387 = vsel %vm1088, %v1047, 0
  %v1390 = vsel %vm1088, %v1048, 0
  %v1393 = vsel %vm1088, %v1049, 0
  %v1396 = vsel %vm1088, %v1050, 0
  %v1399 = vsel %vm1088, %v1051, 0
  %v1402 = vsel %vm1088, %v1052, 0
  %v1405 = vsel %vm1088, %v1053, 0
  %v1408 = vsel %vm1088, %v1054, 0
  %v1411 = vsel %vm1088, %v1055, 0
  %v1414 = vsel %vm1088, %v1056, 0
  %v1417 = vsel %vm1088, %v1057, 0
  %v1420 = vsel %vm1088, %v1058, 0
  %v1423 = vsel %vm1088, %v1059, 0
  %v1426 = vsel %vm1088, %v1060, 0
  %v1429 = vsel %vm1088, %v1061, 0
  %v1432 = vsel %vm1088, %v1062, 0
  %v1435 = vsel %vm1088, %v1063, 0
  %v1438 = vsel %vm1088, %v1064, 0
  %v1441 = vsel %vm1088, %v1065, 0
  %v1444 = vsel %vm1088, %v1066, 0
  %v1447 = vsel %vm1088, %v1067, 0
  %v1450 = vsel %vm1088, %v1068, 0
  %v1453 = vsel %vm1088, %v1069, 0
  %v1456 = vsel %vm1088, %v1070, 0
  %v1459 = vsel %vm1088, %v1071, 0
  %v1462 = vsel %vm1088, %v1072, 0
  %v1465 = vsel %vm1088, %v1073, 0
  %v1468 = vsel %vm1088, %v1074, 0
  %v1471 = vsel %vm1088, %v1075, 0
  %1473 = vmatpush.msra.mxu0 0.0
  %1474 = vmatpush.msra.mxu0 0.0
  %1475 = vmatpush.msra.mxu0 0.0
  %1476 = vmatpush.msra.mxu0 0.0
  %1477 = vmatpush.msra.mxu0 0.0
  %1478 = vmatpush.msra.mxu0 0.0
  %1479 = vmatpush.msra.mxu0 0.0
  %1480 = vmatpush.msra.mxu0 0.0
  %1481 = vmatpush.msra.mxu0 %v1083
  %1482 = vmatpush.msra.mxu0 %v1082
  %1483 = vmatpush.msra.mxu0 %v1081
  %1484 = vmatpush.msra.mxu0 %v1080
  %1485 = vmatpush.msra.mxu0 %v1079
  %1486 = vmatpush.msra.mxu0 %v1078
  %1487 = vmatpush.msra.mxu0 %v1077
  %1488 = vmatpush.msra.mxu0 %v1076
  %1489 = vmatmul.f32.gmra.mxu0 %v1090
  %v1490 = vpop.f32.mrf.mxu0
  %v1491 = vadd.f32 %v1086, %v1490
  %1492 = vmatmul.f32.gmra.mxu0 %v1093
  %v1493 = vpop.f32.mrf.mxu0
  %v1494 = vadd.f32 %v1086, %v1493
  %1495 = vmatmul.f32.gmra.mxu0 %v1096
  %v1496 = vpop.f32.mrf.mxu0
  %v1497 = vadd.f32 %v1086, %v1496
  %1498 = vmatmul.f32.gmra.mxu0 %v1099
  %v1499 = vpop.f32.mrf.mxu0
  %v1500 = vadd.f32 %v1086, %v1499
  %1501 = vmatmul.f32.gmra.mxu0 %v1102
  %v1502 = vpop.f32.mrf.mxu0
  %v1503 = vadd.f32 %v1086, %v1502
  %1504 = vmatmul.f32.gmra.mxu0 %v1105
  %v1505 = vpop.f32.mrf.mxu0
  %v1506 = vadd.f32 %v1086, %v1505
  %1507 = vmatmul.f32.gmra.mxu0 %v1108
  %v1508 = vpop.f32.mrf.mxu0
  %v1509 = vadd.f32 %v1086, %v1508
  %1510 = vmatmul.f32.gmra.mxu0 %v1111
  %v1511 = vpop.f32.mrf.mxu0
  %v1512 = vadd.f32 %v1086, %v1511
  %1513 = vmatmul.f32.gmra.mxu0 %v1114
  %v1514 = vpop.f32.mrf.mxu0
  %v1515 = vadd.f32 %v1086, %v1514
  %1516 = vmatmul.f32.gmra.mxu0 %v1117
  %v1517 = vpop.f32.mrf.mxu0
  %v1518 = vadd.f32 %v1086, %v1517
  %1519 = vmatmul.f32.gmra.mxu0 %v1120
  %v1520 = vpop.f32.mrf.mxu0
  %v1521 = vadd.f32 %v1086, %v1520
  %1522 = vmatmul.f32.gmra.mxu0 %v1123
  %v1523 = vpop.f32.mrf.mxu0
  %v1524 = vadd.f32 %v1086, %v1523
  %1525 = vmatmul.f32.gmra.mxu0 %v1126
  %v1526 = vpop.f32.mrf.mxu0
  %v1527 = vadd.f32 %v1086, %v1526
  %1528 = vmatmul.f32.gmra.mxu0 %v1129
  %v1529 = vpop.f32.mrf.mxu0
  %v1530 = vadd.f32 %v1086, %v1529
  %1531 = vmatmul.f32.gmra.mxu0 %v1132
  %v1532 = vpop.f32.mrf.mxu0
  %v1533 = vadd.f32 %v1086, %v1532
  %1534 = vmatmul.f32.gmra.mxu0 %v1135
  %v1535 = vpop.f32.mrf.mxu0
  %v1536 = vadd.f32 %v1086, %v1535
  %1537 = vmatmul.f32.gmra.mxu0 %v1138
  %v1538 = vpop.f32.mrf.mxu0
  %v1539 = vadd.f32 %v1086, %v1538
  %1540 = vmatmul.f32.gmra.mxu0 %v1141
  %v1541 = vpop.f32.mrf.mxu0
  %v1542 = vadd.f32 %v1086, %v1541
  %1543 = vmatmul.f32.gmra.mxu0 %v1144
  %v1544 = vpop.f32.mrf.mxu0
  %v1545 = vadd.f32 %v1086, %v1544
  %1546 = vmatmul.f32.gmra.mxu0 %v1147
  %v1547 = vpop.f32.mrf.mxu0
  %v1548 = vadd.f32 %v1086, %v1547
  %1549 = vmatmul.f32.gmra.mxu0 %v1150
  %v1550 = vpop.f32.mrf.mxu0
  %v1551 = vadd.f32 %v1086, %v1550
  %1552 = vmatmul.f32.gmra.mxu0 %v1153
  %v1553 = vpop.f32.mrf.mxu0
  %v1554 = vadd.f32 %v1086, %v1553
  %1555 = vmatmul.f32.gmra.mxu0 %v1156
  %v1556 = vpop.f32.mrf.mxu0
  %v1557 = vadd.f32 %v1086, %v1556
  %1558 = vmatmul.f32.gmra.mxu0 %v1159
  %v1559 = vpop.f32.mrf.mxu0
  %v1560 = vadd.f32 %v1086, %v1559
  %1561 = vmatmul.f32.gmra.mxu0 %v1162
  %v1562 = vpop.f32.mrf.mxu0
  %v1563 = vadd.f32 %v1086, %v1562
  %1564 = vmatmul.f32.gmra.mxu0 %v1165
  %v1565 = vpop.f32.mrf.mxu0
  %v1566 = vadd.f32 %v1086, %v1565
  %1567 = vmatmul.f32.gmra.mxu0 %v1168
  %v1568 = vpop.f32.mrf.mxu0
  %v1569 = vadd.f32 %v1086, %v1568
  %1570 = vmatmul.f32.gmra.mxu0 %v1171
  %v1571 = vpop.f32.mrf.mxu0
  %v1572 = vadd.f32 %v1086, %v1571
  %1573 = vmatmul.f32.gmra.mxu0 %v1174
  %v1574 = vpop.f32.mrf.mxu0
  %v1575 = vadd.f32 %v1086, %v1574
  %1576 = vmatmul.f32.gmra.mxu0 %v1177
  %v1577 = vpop.f32.mrf.mxu0
  %v1578 = vadd.f32 %v1086, %v1577
  %1579 = vmatmul.f32.gmra.mxu0 %v1180
  %v1580 = vpop.f32.mrf.mxu0
  %v1581 = vadd.f32 %v1086, %v1580
  %1582 = vmatmul.f32.gmra.mxu0 %v1183
  %v1583 = vpop.f32.mrf.mxu0
  %v1584 = vadd.f32 %v1086, %v1583
  %1585 = vmatmul.f32.gmra.mxu0 %v1186
  %v1586 = vpop.f32.mrf.mxu0
  %v1587 = vadd.f32 %v1086, %v1586
  %1588 = vmatmul.f32.gmra.mxu0 %v1189
  %v1589 = vpop.f32.mrf.mxu0
  %v1590 = vadd.f32 %v1086, %v1589
  %1591 = vmatmul.f32.gmra.mxu0 %v1192
  %v1592 = vpop.f32.mrf.mxu0
  %v1593 = vadd.f32 %v1086, %v1592
  %1594 = vmatmul.f32.gmra.mxu0 %v1195
  %v1595 = vpop.f32.mrf.mxu0
  %v1596 = vadd.f32 %v1086, %v1595
  %1597 = vmatmul.f32.gmra.mxu0 %v1198
  %v1598 = vpop.f32.mrf.mxu0
  %v1599 = vadd.f32 %v1086, %v1598
  %1600 = vmatmul.f32.gmra.mxu0 %v1201
  %v1601 = vpop.f32.mrf.mxu0
  %v1602 = vadd.f32 %v1086, %v1601
  %1603 = vmatmul.f32.gmra.mxu0 %v1204
  %v1604 = vpop.f32.mrf.mxu0
  %v1605 = vadd.f32 %v1086, %v1604
  %1606 = vmatmul.f32.gmra.mxu0 %v1207
  %v1607 = vpop.f32.mrf.mxu0
  %v1608 = vadd.f32 %v1086, %v1607
  %1609 = vmatmul.f32.gmra.mxu0 %v1210
  %v1610 = vpop.f32.mrf.mxu0
  %v1611 = vadd.f32 %v1086, %v1610
  %1612 = vmatmul.f32.gmra.mxu0 %v1213
  %v1613 = vpop.f32.mrf.mxu0
  %v1614 = vadd.f32 %v1086, %v1613
  %1615 = vmatmul.f32.gmra.mxu0 %v1216
  %v1616 = vpop.f32.mrf.mxu0
  %v1617 = vadd.f32 %v1086, %v1616
  %1618 = vmatmul.f32.gmra.mxu0 %v1219
  %v1619 = vpop.f32.mrf.mxu0
  %v1620 = vadd.f32 %v1086, %v1619
  %1621 = vmatmul.f32.gmra.mxu0 %v1222
  %v1622 = vpop.f32.mrf.mxu0
  %v1623 = vadd.f32 %v1086, %v1622
  %1624 = vmatmul.f32.gmra.mxu0 %v1225
  %v1625 = vpop.f32.mrf.mxu0
  %v1626 = vadd.f32 %v1086, %v1625
  %1627 = vmatmul.f32.gmra.mxu0 %v1228
  %v1628 = vpop.f32.mrf.mxu0
  %v1629 = vadd.f32 %v1086, %v1628
  %1630 = vmatmul.f32.gmra.mxu0 %v1231
  %v1631 = vpop.f32.mrf.mxu0
  %v1632 = vadd.f32 %v1086, %v1631
  %1633 = vmatmul.f32.gmra.mxu0 %v1234
  %v1634 = vpop.f32.mrf.mxu0
  %v1635 = vadd.f32 %v1086, %v1634
  %1636 = vmatmul.f32.gmra.mxu0 %v1237
  %v1637 = vpop.f32.mrf.mxu0
  %v1638 = vadd.f32 %v1086, %v1637
  %1639 = vmatmul.f32.gmra.mxu0 %v1240
  %v1640 = vpop.f32.mrf.mxu0
  %v1641 = vadd.f32 %v1086, %v1640
  %1642 = vmatmul.f32.gmra.mxu0 %v1243
  %v1643 = vpop.f32.mrf.mxu0
  %v1644 = vadd.f32 %v1086, %v1643
  %1645 = vmatmul.f32.gmra.mxu0 %v1246
  %v1646 = vpop.f32.mrf.mxu0
  %v1647 = vadd.f32 %v1086, %v1646
  %1648 = vmatmul.f32.gmra.mxu0 %v1249
  %v1649 = vpop.f32.mrf.mxu0
  %v1650 = vadd.f32 %v1086, %v1649
  %1651 = vmatmul.f32.gmra.mxu0 %v1252
  %v1652 = vpop.f32.mrf.mxu0
  %v1653 = vadd.f32 %v1086, %v1652
  %1654 = vmatmul.f32.gmra.mxu0 %v1255
  %v1655 = vpop.f32.mrf.mxu0
  %v1656 = vadd.f32 %v1086, %v1655
  %1657 = vmatmul.f32.gmra.mxu0 %v1258
  %v1658 = vpop.f32.mrf.mxu0
  %v1659 = vadd.f32 %v1086, %v1658
  %1660 = vmatmul.f32.gmra.mxu0 %v1261
  %v1661 = vpop.f32.mrf.mxu0
  %v1662 = vadd.f32 %v1086, %v1661
  %1663 = vmatmul.f32.gmra.mxu0 %v1264
  %v1664 = vpop.f32.mrf.mxu0
  %v1665 = vadd.f32 %v1086, %v1664
  %1666 = vmatmul.f32.gmra.mxu0 %v1267
  %v1667 = vpop.f32.mrf.mxu0
  %v1668 = vadd.f32 %v1086, %v1667
  %1669 = vmatmul.f32.gmra.mxu0 %v1270
  %v1670 = vpop.f32.mrf.mxu0
  %v1671 = vadd.f32 %v1086, %v1670
  %1672 = vmatmul.f32.gmra.mxu0 %v1273
  %v1673 = vpop.f32.mrf.mxu0
  %v1674 = vadd.f32 %v1086, %v1673
  %1675 = vmatmul.f32.gmra.mxu0 %v1276
  %v1676 = vpop.f32.mrf.mxu0
  %v1677 = vadd.f32 %v1086, %v1676
  %1678 = vmatmul.f32.gmra.mxu0 %v1279
  %v1679 = vpop.f32.mrf.mxu0
  %v1680 = vadd.f32 %v1086, %v1679
  %1681 = vmatmul.f32.gmra.mxu0 %v1282
  %v1682 = vpop.f32.mrf.mxu0
  %v1683 = vadd.f32 %v1086, %v1682
  %1684 = vmatmul.f32.gmra.mxu0 %v1285
  %v1685 = vpop.f32.mrf.mxu0
  %v1686 = vadd.f32 %v1086, %v1685
  %1687 = vmatmul.f32.gmra.mxu0 %v1288
  %v1688 = vpop.f32.mrf.mxu0
  %v1689 = vadd.f32 %v1086, %v1688
  %1690 = vmatmul.f32.gmra.mxu0 %v1291
  %v1691 = vpop.f32.mrf.mxu0
  %v1692 = vadd.f32 %v1086, %v1691
  %1693 = vmatmul.f32.gmra.mxu0 %v1294
  %v1694 = vpop.f32.mrf.mxu0
  %v1695 = vadd.f32 %v1086, %v1694
  %1696 = vmatmul.f32.gmra.mxu0 %v1297
  %v1697 = vpop.f32.mrf.mxu0
  %v1698 = vadd.f32 %v1086, %v1697
  %1699 = vmatmul.f32.gmra.mxu0 %v1300
  %v1700 = vpop.f32.mrf.mxu0
  %v1701 = vadd.f32 %v1086, %v1700
  %1702 = vmatmul.f32.gmra.mxu0 %v1303
  %v1703 = vpop.f32.mrf.mxu0
  %v1704 = vadd.f32 %v1086, %v1703
  %1705 = vmatmul.f32.gmra.mxu0 %v1306
  %v1706 = vpop.f32.mrf.mxu0
  %v1707 = vadd.f32 %v1086, %v1706
  %1708 = vmatmul.f32.gmra.mxu0 %v1309
  %v1709 = vpop.f32.mrf.mxu0
  %v1710 = vadd.f32 %v1086, %v1709
  %1711 = vmatmul.f32.gmra.mxu0 %v1312
  %v1712 = vpop.f32.mrf.mxu0
  %v1713 = vadd.f32 %v1086, %v1712
  %1714 = vmatmul.f32.gmra.mxu0 %v1315
  %v1715 = vpop.f32.mrf.mxu0
  %v1716 = vadd.f32 %v1086, %v1715
  %1717 = vmatmul.f32.gmra.mxu0 %v1318
  %v1718 = vpop.f32.mrf.mxu0
  %v1719 = vadd.f32 %v1086, %v1718
  %1720 = vmatmul.f32.gmra.mxu0 %v1321
  %v1721 = vpop.f32.mrf.mxu0
  %v1722 = vadd.f32 %v1086, %v1721
  %1723 = vmatmul.f32.gmra.mxu0 %v1324
  %v1724 = vpop.f32.mrf.mxu0
  %v1725 = vadd.f32 %v1086, %v1724
  %1726 = vmatmul.f32.gmra.mxu0 %v1327
  %v1727 = vpop.f32.mrf.mxu0
  %v1728 = vadd.f32 %v1086, %v1727
  %1729 = vmatmul.f32.gmra.mxu0 %v1330
  %v1730 = vpop.f32.mrf.mxu0
  %v1731 = vadd.f32 %v1086, %v1730
  %1732 = vmatmul.f32.gmra.mxu0 %v1333
  %v1733 = vpop.f32.mrf.mxu0
  %v1734 = vadd.f32 %v1086, %v1733
  %1735 = vmatmul.f32.gmra.mxu0 %v1336
  %v1736 = vpop.f32.mrf.mxu0
  %v1737 = vadd.f32 %v1086, %v1736
  %1738 = vmatmul.f32.gmra.mxu0 %v1339
  %v1739 = vpop.f32.mrf.mxu0
  %v1740 = vadd.f32 %v1086, %v1739
  %1741 = vmatmul.f32.gmra.mxu0 %v1342
  %v1742 = vpop.f32.mrf.mxu0
  %v1743 = vadd.f32 %v1086, %v1742
  %1744 = vmatmul.f32.gmra.mxu0 %v1345
  %v1745 = vpop.f32.mrf.mxu0
  %v1746 = vadd.f32 %v1086, %v1745
  %1747 = vmatmul.f32.gmra.mxu0 %v1348
  %v1748 = vpop.f32.mrf.mxu0
  %v1749 = vadd.f32 %v1086, %v1748
  %1750 = vmatmul.f32.gmra.mxu0 %v1351
  %v1751 = vpop.f32.mrf.mxu0
  %v1752 = vadd.f32 %v1086, %v1751
  %1753 = vmatmul.f32.gmra.mxu0 %v1354
  %v1754 = vpop.f32.mrf.mxu0
  %v1755 = vadd.f32 %v1086, %v1754
  %1756 = vmatmul.f32.gmra.mxu0 %v1357
  %v1757 = vpop.f32.mrf.mxu0
  %v1758 = vadd.f32 %v1086, %v1757
  %1759 = vmatmul.f32.gmra.mxu0 %v1360
  %v1760 = vpop.f32.mrf.mxu0
  %v1761 = vadd.f32 %v1086, %v1760
  %1762 = vmatmul.f32.gmra.mxu0 %v1363
  %v1763 = vpop.f32.mrf.mxu0
  %v1764 = vadd.f32 %v1086, %v1763
  %1765 = vmatmul.f32.gmra.mxu0 %v1366
  %v1766 = vpop.f32.mrf.mxu0
  %v1767 = vadd.f32 %v1086, %v1766
  %1768 = vmatmul.f32.gmra.mxu0 %v1369
  %v1769 = vpop.f32.mrf.mxu0
  %v1770 = vadd.f32 %v1086, %v1769
  %1771 = vmatmul.f32.gmra.mxu0 %v1372
  %v1772 = vpop.f32.mrf.mxu0
  %v1773 = vadd.f32 %v1086, %v1772
  %1774 = vmatmul.f32.gmra.mxu0 %v1375
  %v1775 = vpop.f32.mrf.mxu0
  %v1776 = vadd.f32 %v1086, %v1775
  %1777 = vmatmul.f32.gmra.mxu0 %v1378
  %v1778 = vpop.f32.mrf.mxu0
  %v1779 = vadd.f32 %v1086, %v1778
  %1780 = vmatmul.f32.gmra.mxu0 %v1381
  %v1781 = vpop.f32.mrf.mxu0
  %v1782 = vadd.f32 %v1086, %v1781
  %1783 = vmatmul.f32.gmra.mxu0 %v1384
  %v1784 = vpop.f32.mrf.mxu0
  %v1785 = vadd.f32 %v1086, %v1784
  %1786 = vmatmul.f32.gmra.mxu0 %v1387
  %v1787 = vpop.f32.mrf.mxu0
  %v1788 = vadd.f32 %v1086, %v1787
  %1789 = vmatmul.f32.gmra.mxu0 %v1390
  %v1790 = vpop.f32.mrf.mxu0
  %v1791 = vadd.f32 %v1086, %v1790
  %1792 = vmatmul.f32.gmra.mxu0 %v1393
  %v1793 = vpop.f32.mrf.mxu0
  %v1794 = vadd.f32 %v1086, %v1793
  %1795 = vmatmul.f32.gmra.mxu0 %v1396
  %v1796 = vpop.f32.mrf.mxu0
  %v1797 = vadd.f32 %v1086, %v1796
  %1798 = vmatmul.f32.gmra.mxu0 %v1399
  %v1799 = vpop.f32.mrf.mxu0
  %v1800 = vadd.f32 %v1086, %v1799
  %1801 = vmatmul.f32.gmra.mxu0 %v1402
  %v1802 = vpop.f32.mrf.mxu0
  %v1803 = vadd.f32 %v1086, %v1802
  %1804 = vmatmul.f32.gmra.mxu0 %v1405
  %v1805 = vpop.f32.mrf.mxu0
  %v1806 = vadd.f32 %v1086, %v1805
  %1807 = vmatmul.f32.gmra.mxu0 %v1408
  %v1808 = vpop.f32.mrf.mxu0
  %v1809 = vadd.f32 %v1086, %v1808
  %1810 = vmatmul.f32.gmra.mxu0 %v1411
  %v1811 = vpop.f32.mrf.mxu0
  %v1812 = vadd.f32 %v1086, %v1811
  %1813 = vmatmul.f32.gmra.mxu0 %v1414
  %v1814 = vpop.f32.mrf.mxu0
  %v1815 = vadd.f32 %v1086, %v1814
  %1816 = vmatmul.f32.gmra.mxu0 %v1417
  %v1817 = vpop.f32.mrf.mxu0
  %v1818 = vadd.f32 %v1086, %v1817
  %1819 = vmatmul.f32.gmra.mxu0 %v1420
  %v1820 = vpop.f32.mrf.mxu0
  %v1821 = vadd.f32 %v1086, %v1820
  %1822 = vmatmul.f32.gmra.mxu0 %v1423
  %v1823 = vpop.f32.mrf.mxu0
  %v1824 = vadd.f32 %v1086, %v1823
  %1825 = vmatmul.f32.gmra.mxu0 %v1426
  %v1826 = vpop.f32.mrf.mxu0
  %v1827 = vadd.f32 %v1086, %v1826
  %1828 = vmatmul.f32.gmra.mxu0 %v1429
  %v1829 = vpop.f32.mrf.mxu0
  %v1830 = vadd.f32 %v1086, %v1829
  %1831 = vmatmul.f32.gmra.mxu0 %v1432
  %v1832 = vpop.f32.mrf.mxu0
  %v1833 = vadd.f32 %v1086, %v1832
  %1834 = vmatmul.f32.gmra.mxu0 %v1435
  %v1835 = vpop.f32.mrf.mxu0
  %v1836 = vadd.f32 %v1086, %v1835
  %1837 = vmatmul.f32.gmra.mxu0 %v1438
  %v1838 = vpop.f32.mrf.mxu0
  %v1839 = vadd.f32 %v1086, %v1838
  %1840 = vmatmul.f32.gmra.mxu0 %v1441
  %v1841 = vpop.f32.mrf.mxu0
  %v1842 = vadd.f32 %v1086, %v1841
  %1843 = vmatmul.f32.gmra.mxu0 %v1444
  %v1844 = vpop.f32.mrf.mxu0
  %v1845 = vadd.f32 %v1086, %v1844
  %1846 = vmatmul.f32.gmra.mxu0 %v1447
  %v1847 = vpop.f32.mrf.mxu0
  %v1848 = vadd.f32 %v1086, %v1847
  %1849 = vmatmul.f32.gmra.mxu0 %v1450
  %v1850 = vpop.f32.mrf.mxu0
  %v1851 = vadd.f32 %v1086, %v1850
  %1852 = vmatmul.f32.gmra.mxu0 %v1453
  %v1853 = vpop.f32.mrf.mxu0
  %v1854 = vadd.f32 %v1086, %v1853
  %1855 = vmatmul.f32.gmra.mxu0 %v1456
  %v1856 = vpop.f32.mrf.mxu0
  %v1857 = vadd.f32 %v1086, %v1856
  %1858 = vmatmul.f32.gmra.mxu0 %v1459
  %v1859 = vpop.f32.mrf.mxu0
  %v1860 = vadd.f32 %v1086, %v1859
  %1861 = vmatmul.f32.gmra.mxu0 %v1462
  %v1862 = vpop.f32.mrf.mxu0
  %v1863 = vadd.f32 %v1086, %v1862
  %1864 = vmatmul.f32.gmra.mxu0 %v1465
  %v1865 = vpop.f32.mrf.mxu0
  %v1866 = vadd.f32 %v1086, %v1865
  %1867 = vmatmul.f32.gmra.mxu0 %v1468
  %v1868 = vpop.f32.mrf.mxu0
  %v1869 = vadd.f32 %v1086, %v1868
  %1870 = vmatmul.f32.gmra.mxu0 %v1471
  %v1871 = vpop.f32.mrf.mxu0
  %v1872 = vadd.f32 %v1086, %v1871
  %1873 = vdwg.mxu0
  %v1874 = vmax.f32 %v1491, 0.0
  %v1875 = vmax.f32 %v1494, 0.0
  %v1876 = vmax.f32 %v1497, 0.0
  %v1877 = vmax.f32 %v1500, 0.0
  %v1878 = vmax.f32 %v1503, 0.0
  %v1879 = vmax.f32 %v1506, 0.0
  %v1880 = vmax.f32 %v1509, 0.0
  %v1881 = vmax.f32 %v1512, 0.0
  %v1882 = vmax.f32 %v1515, 0.0
  %v1883 = vmax.f32 %v1518, 0.0
  %v1884 = vmax.f32 %v1521, 0.0
  %v1885 = vmax.f32 %v1524, 0.0
  %v1886 = vmax.f32 %v1527, 0.0
  %v1887 = vmax.f32 %v1530, 0.0
  %v1888 = vmax.f32 %v1533, 0.0
  %v1889 = vmax.f32 %v1536, 0.0
  %v1890 = vmax.f32 %v1539, 0.0
  %v1891 = vmax.f32 %v1542, 0.0
  %v1892 = vmax.f32 %v1545, 0.0
  %v1893 = vmax.f32 %v1548, 0.0
  %v1894 = vmax.f32 %v1551, 0.0
  %v1895 = vmax.f32 %v1554, 0.0
  %v1896 = vmax.f32 %v1557, 0.0
  %v1897 = vmax.f32 %v1560, 0.0
  %v1898 = vmax.f32 %v1563, 0.0
  %v1899 = vmax.f32 %v1566, 0.0
  %v1900 = vmax.f32 %v1569, 0.0
  %v1901 = vmax.f32 %v1572, 0.0
  %v1902 = vmax.f32 %v1575, 0.0
  %v1903 = vmax.f32 %v1578, 0.0
  %v1904 = vmax.f32 %v1581, 0.0
  %v1905 = vmax.f32 %v1584, 0.0
  %v1906 = vmax.f32 %v1587, 0.0
  %v1907 = vmax.f32 %v1590, 0.0
  %v1908 = vmax.f32 %v1593, 0.0
  %v1909 = vmax.f32 %v1596, 0.0
  %v1910 = vmax.f32 %v1599, 0.0
  %v1911 = vmax.f32 %v1602, 0.0
  %v1912 = vmax.f32 %v1605, 0.0
  %v1913 = vmax.f32 %v1608, 0.0
  %v1914 = vmax.f32 %v1611, 0.0
  %v1915 = vmax.f32 %v1614, 0.0
  %v1916 = vmax.f32 %v1617, 0.0
  %v1917 = vmax.f32 %v1620, 0.0
  %v1918 = vmax.f32 %v1623, 0.0
  %v1919 = vmax.f32 %v1626, 0.0
  %v1920 = vmax.f32 %v1629, 0.0
  %v1921 = vmax.f32 %v1632, 0.0
  %v1922 = vmax.f32 %v1635, 0.0
  %v1923 = vmax.f32 %v1638, 0.0
  %v1924 = vmax.f32 %v1641, 0.0
  %v1925 = vmax.f32 %v1644, 0.0
  %v1926 = vmax.f32 %v1647, 0.0
  %v1927 = vmax.f32 %v1650, 0.0
  %v1928 = vmax.f32 %v1653, 0.0
  %v1929 = vmax.f32 %v1656, 0.0
  %v1930 = vmax.f32 %v1659, 0.0
  %v1931 = vmax.f32 %v1662, 0.0
  %v1932 = vmax.f32 %v1665, 0.0
  %v1933 = vmax.f32 %v1668, 0.0
  %v1934 = vmax.f32 %v1671, 0.0
  %v1935 = vmax.f32 %v1674, 0.0
  %v1936 = vmax.f32 %v1677, 0.0
  %v1937 = vmax.f32 %v1680, 0.0
  %v1938 = vmax.f32 %v1683, 0.0
  %v1939 = vmax.f32 %v1686, 0.0
  %v1940 = vmax.f32 %v1689, 0.0
  %v1941 = vmax.f32 %v1692, 0.0
  %v1942 = vmax.f32 %v1695, 0.0
  %v1943 = vmax.f32 %v1698, 0.0
  %v1944 = vmax.f32 %v1701, 0.0
  %v1945 = vmax.f32 %v1704, 0.0
  %v1946 = vmax.f32 %v1707, 0.0
  %v1947 = vmax.f32 %v1710, 0.0
  %v1948 = vmax.f32 %v1713, 0.0
  %v1949 = vmax.f32 %v1716, 0.0
  %v1950 = vmax.f32 %v1719, 0.0
  %v1951 = vmax.f32 %v1722, 0.0
  %v1952 = vmax.f32 %v1725, 0.0
  %v1953 = vmax.f32 %v1728, 0.0
  %v1954 = vmax.f32 %v1731, 0.0
  %v1955 = vmax.f32 %v1734, 0.0
  %v1956 = vmax.f32 %v1737, 0.0
  %v1957 = vmax.f32 %v1740, 0.0
  %v1958 = vmax.f32 %v1743, 0.0
  %v1959 = vmax.f32 %v1746, 0.0
  %v1960 = vmax.f32 %v1749, 0.0
  %v1961 = vmax.f32 %v1752, 0.0
  %v1962 = vmax.f32 %v1755, 0.0
  %v1963 = vmax.f32 %v1758, 0.0
  %v1964 = vmax.f32 %v1761, 0.0
  %v1965 = vmax.f32 %v1764, 0.0
  %v1966 = vmax.f32 %v1767, 0.0
  %v1967 = vmax.f32 %v1770, 0.0
  %v1968 = vmax.f32 %v1773, 0.0
  %v1969 = vmax.f32 %v1776, 0.0
  %v1970 = vmax.f32 %v1779, 0.0
  %v1971 = vmax.f32 %v1782, 0.0
  %v1972 = vmax.f32 %v1785, 0.0
  %v1973 = vmax.f32 %v1788, 0.0
  %v1974 = vmax.f32 %v1791, 0.0
  %v1975 = vmax.f32 %v1794, 0.0
  %v1976 = vmax.f32 %v1797, 0.0
  %v1977 = vmax.f32 %v1800, 0.0
  %v1978 = vmax.f32 %v1803, 0.0
  %v1979 = vmax.f32 %v1806, 0.0
  %v1980 = vmax.f32 %v1809, 0.0
  %v1981 = vmax.f32 %v1812, 0.0
  %v1982 = vmax.f32 %v1815, 0.0
  %v1983 = vmax.f32 %v1818, 0.0
  %v1984 = vmax.f32 %v1821, 0.0
  %v1985 = vmax.f32 %v1824, 0.0
  %v1986 = vmax.f32 %v1827, 0.0
  %v1987 = vmax.f32 %v1830, 0.0
  %v1988 = vmax.f32 %v1833, 0.0
  %v1989 = vmax.f32 %v1836, 0.0
  %v1990 = vmax.f32 %v1839, 0.0
  %v1991 = vmax.f32 %v1842, 0.0
  %v1992 = vmax.f32 %v1845, 0.0
  %v1993 = vmax.f32 %v1848, 0.0
  %v1994 = vmax.f32 %v1851, 0.0
  %v1995 = vmax.f32 %v1854, 0.0
  %v1996 = vmax.f32 %v1857, 0.0
  %v1997 = vmax.f32 %v1860, 0.0
  %v1998 = vmax.f32 %v1863, 0.0
  %v1999 = vmax.f32 %v1866, 0.0
  %v2000 = vmax.f32 %v1869, 0.0
  %v2001 = vmax.f32 %v1872, 0.0
  %v2002 = vld [vmem:[%s5] sm:$0x1]
  %v2004 = vperm.slane %v2002, 0
  %v2006 = vmul.f32 %v1874, %v2004
  %v2007 = vmul.f32 %v1875, %v2004
  %v2008 = vmul.f32 %v1876, %v2004
  %v2009 = vmul.f32 %v1877, %v2004
  %v2010 = vmul.f32 %v1878, %v2004
  %v2011 = vmul.f32 %v1879, %v2004
  %v2012 = vmul.f32 %v1880, %v2004
  %v2013 = vmul.f32 %v1881, %v2004
  %v2014 = vmul.f32 %v1882, %v2004
  %v2015 = vmul.f32 %v1883, %v2004
  %v2016 = vmul.f32 %v1884, %v2004
  %v2017 = vmul.f32 %v1885, %v2004
  %v2018 = vmul.f32 %v1886, %v2004
  %v2019 = vmul.f32 %v1887, %v2004
  %v2020 = vmul.f32 %v1888, %v2004
  %v2021 = vmul.f32 %v1889, %v2004
  %v2022 = vmul.f32 %v1890, %v2004
  %v2023 = vmul.f32 %v1891, %v2004
  %v2024 = vmul.f32 %v1892, %v2004
  %v2025 = vmul.f32 %v1893, %v2004
  %v2026 = vmul.f32 %v1894, %v2004
  %v2027 = vmul.f32 %v1895, %v2004
  %v2028 = vmul.f32 %v1896, %v2004
  %v2029 = vmul.f32 %v1897, %v2004
  %v2030 = vmul.f32 %v1898, %v2004
  %v2031 = vmul.f32 %v1899, %v2004
  %v2032 = vmul.f32 %v1900, %v2004
  %v2033 = vmul.f32 %v1901, %v2004
  %v2034 = vmul.f32 %v1902, %v2004
  %v2035 = vmul.f32 %v1903, %v2004
  %v2036 = vmul.f32 %v1904, %v2004
  %v2037 = vmul.f32 %v1905, %v2004
  %v2038 = vmul.f32 %v1906, %v2004
  %v2039 = vmul.f32 %v1907, %v2004
  %v2040 = vmul.f32 %v1908, %v2004
  %v2041 = vmul.f32 %v1909, %v2004
  %v2042 = vmul.f32 %v1910, %v2004
  %v2043 = vmul.f32 %v1911, %v2004
  %v2044 = vmul.f32 %v1912, %v2004
  %v2045 = vmul.f32 %v1913, %v2004
  %v2046 = vmul.f32 %v1914, %v2004
  %v2047 = vmul.f32 %v1915, %v2004
  %v2048 = vmul.f32 %v1916, %v2004
  %v2049 = vmul.f32 %v1917, %v2004
  %v2050 = vmul.f32 %v1918, %v2004
  %v2051 = vmul.f32 %v1919, %v2004
  %v2052 = vmul.f32 %v1920, %v2004
  %v2053 = vmul.f32 %v1921, %v2004
  %v2054 = vmul.f32 %v1922, %v2004
  %v2055 = vmul.f32 %v1923, %v2004
  %v2056 = vmul.f32 %v1924, %v2004
  %v2057 = vmul.f32 %v1925, %v2004
  %v2058 = vmul.f32 %v1926, %v2004
  %v2059 = vmul.f32 %v1927, %v2004
  %v2060 = vmul.f32 %v1928, %v2004
  %v2061 = vmul.f32 %v1929, %v2004
  %v2062 = vmul.f32 %v1930, %v2004
  %v2063 = vmul.f32 %v1931, %v2004
  %v2064 = vmul.f32 %v1932, %v2004
  %v2065 = vmul.f32 %v1933, %v2004
  %v2066 = vmul.f32 %v1934, %v2004
  %v2067 = vmul.f32 %v1935, %v2004
  %v2068 = vmul.f32 %v1936, %v2004
  %v2069 = vmul.f32 %v1937, %v2004
  %v2070 = vmul.f32 %v1938, %v2004
  %v2071 = vmul.f32 %v1939, %v2004
  %v2072 = vmul.f32 %v1940, %v2004
  %v2073 = vmul.f32 %v1941, %v2004
  %v2074 = vmul.f32 %v1942, %v2004
  %v2075 = vmul.f32 %v1943, %v2004
  %v2076 = vmul.f32 %v1944, %v2004
  %v2077 = vmul.f32 %v1945, %v2004
  %v2078 = vmul.f32 %v1946, %v2004
  %v2079 = vmul.f32 %v1947, %v2004
  %v2080 = vmul.f32 %v1948, %v2004
  %v2081 = vmul.f32 %v1949, %v2004
  %v2082 = vmul.f32 %v1950, %v2004
  %v2083 = vmul.f32 %v1951, %v2004
  %v2084 = vmul.f32 %v1952, %v2004
  %v2085 = vmul.f32 %v1953, %v2004
  %v2086 = vmul.f32 %v1954, %v2004
  %v2087 = vmul.f32 %v1955, %v2004
  %v2088 = vmul.f32 %v1956, %v2004
  %v2089 = vmul.f32 %v1957, %v2004
  %v2090 = vmul.f32 %v1958, %v2004
  %v2091 = vmul.f32 %v1959, %v2004
  %v2092 = vmul.f32 %v1960, %v2004
  %v2093 = vmul.f32 %v1961, %v2004
  %v2094 = vmul.f32 %v1962, %v2004
  %v2095 = vmul.f32 %v1963, %v2004
  %v2096 = vmul.f32 %v1964, %v2004
  %v2097 = vmul.f32 %v1965, %v2004
  %v2098 = vmul.f32 %v1966, %v2004
  %v2099 = vmul.f32 %v1967, %v2004
  %v2100 = vmul.f32 %v1968, %v2004
  %v2101 = vmul.f32 %v1969, %v2004
  %v2102 = vmul.f32 %v1970, %v2004
  %v2103 = vmul.f32 %v1971, %v2004
  %v2104 = vmul.f32 %v1972, %v2004
  %v2105 = vmul.f32 %v1973, %v2004
  %v2106 = vmul.f32 %v1974, %v2004
  %v2107 = vmul.f32 %v1975, %v2004
  %v2108 = vmul.f32 %v1976, %v2004
  %v2109 = vmul.f32 %v1977, %v2004
  %v2110 = vmul.f32 %v1978, %v2004
  %v2111 = vmul.f32 %v1979, %v2004
  %v2112 = vmul.f32 %v1980, %v2004
  %v2113 = vmul.f32 %v1981, %v2004
  %v2114 = vmul.f32 %v1982, %v2004
  %v2115 = vmul.f32 %v1983, %v2004
  %v2116 = vmul.f32 %v1984, %v2004
  %v2117 = vmul.f32 %v1985, %v2004
  %v2118 = vmul.f32 %v1986, %v2004
  %v2119 = vmul.f32 %v1987, %v2004
  %v2120 = vmul.f32 %v1988, %v2004
  %v2121 = vmul.f32 %v1989, %v2004
  %v2122 = vmul.f32 %v1990, %v2004
  %v2123 = vmul.f32 %v1991, %v2004
  %v2124 = vmul.f32 %v1992, %v2004
  %v2125 = vmul.f32 %v1993, %v2004
  %v2126 = vmul.f32 %v1994, %v2004
  %v2127 = vmul.f32 %v1995, %v2004
  %v2128 = vmul.f32 %v1996, %v2004
  %v2129 = vmul.f32 %v1997, %v2004
  %v2130 = vmul.f32 %v1998, %v2004
  %v2131 = vmul.f32 %v1999, %v2004
  %v2132 = vmul.f32 %v2000, %v2004
  %v2133 = vmul.f32 %v2001, %v2004
  %vm2134 = vcmask 261120
  %v2135 = vsel %vm2134, %v2006, 0.0
  %2136 = vadd.xlane.f32.xlu0 %v2135
  %v2137 = vpop.xlane.xlu0 %2136
  %v2138 = vsel %vm2134, %v2007, 0.0
  %2139 = vadd.xlane.f32.xlu0 %v2138
  %v2140 = vpop.xlane.xlu0 %2139
  %v2141 = vsel %vm2134, %v2008, 0.0
  %2142 = vadd.xlane.f32.xlu0 %v2141
  %v2143 = vpop.xlane.xlu0 %2142
  %v2144 = vsel %vm2134, %v2009, 0.0
  %2145 = vadd.xlane.f32.xlu0 %v2144
  %v2146 = vpop.xlane.xlu0 %2145
  %v2147 = vsel %vm2134, %v2010, 0.0
  %2148 = vadd.xlane.f32.xlu0 %v2147
  %v2149 = vpop.xlane.xlu0 %2148
  %v2150 = vsel %vm2134, %v2011, 0.0
  %2151 = vadd.xlane.f32.xlu0 %v2150
  %v2152 = vpop.xlane.xlu0 %2151
  %v2153 = vsel %vm2134, %v2012, 0.0
  %2154 = vadd.xlane.f32.xlu0 %v2153
  %v2155 = vpop.xlane.xlu0 %2154
  %v2156 = vsel %vm2134, %v2013, 0.0
  %2157 = vadd.xlane.f32.xlu0 %v2156
  %v2158 = vpop.xlane.xlu0 %2157
  %v2159 = vsel %vm2134, %v2014, 0.0
  %2160 = vadd.xlane.f32.xlu0 %v2159
  %v2161 = vpop.xlane.xlu0 %2160
  %v2162 = vsel %vm2134, %v2015, 0.0
  %2163 = vadd.xlane.f32.xlu0 %v2162
  %v2164 = vpop.xlane.xlu0 %2163
  %v2165 = vsel %vm2134, %v2016, 0.0
  %2166 = vadd.xlane.f32.xlu0 %v2165
  %v2167 = vpop.xlane.xlu0 %2166
  %v2168 = vsel %vm2134, %v2017, 0.0
  %2169 = vadd.xlane.f32.xlu0 %v2168
  %v2170 = vpop.xlane.xlu0 %2169
  %v2171 = vsel %vm2134, %v2018, 0.0
  %2172 = vadd.xlane.f32.xlu0 %v2171
  %v2173 = vpop.xlane.xlu0 %2172
  %v2174 = vsel %vm2134, %v2019, 0.0
  %2175 = vadd.xlane.f32.xlu0 %v2174
  %v2176 = vpop.xlane.xlu0 %2175
  %v2177 = vsel %vm2134, %v2020, 0.0
  %2178 = vadd.xlane.f32.xlu0 %v2177
  %v2179 = vpop.xlane.xlu0 %2178
  %v2180 = vsel %vm2134, %v2021, 0.0
  %2181 = vadd.xlane.f32.xlu0 %v2180
  %v2182 = vpop.xlane.xlu0 %2181
  %v2183 = vsel %vm2134, %v2022, 0.0
  %2184 = vadd.xlane.f32.xlu0 %v2183
  %v2185 = vpop.xlane.xlu0 %2184
  %v2186 = vsel %vm2134, %v2023, 0.0
  %2187 = vadd.xlane.f32.xlu0 %v2186
  %v2188 = vpop.xlane.xlu0 %2187
  %v2189 = vsel %vm2134, %v2024, 0.0
  %2190 = vadd.xlane.f32.xlu0 %v2189
  %v2191 = vpop.xlane.xlu0 %2190
  %v2192 = vsel %vm2134, %v2025, 0.0
  %2193 = vadd.xlane.f32.xlu0 %v2192
  %v2194 = vpop.xlane.xlu0 %2193
  %v2195 = vsel %vm2134, %v2026, 0.0
  %2196 = vadd.xlane.f32.xlu0 %v2195
  %v2197 = vpop.xlane.xlu0 %2196
  %v2198 = vsel %vm2134, %v2027, 0.0
  %2199 = vadd.xlane.f32.xlu0 %v2198
  %v2200 = vpop.xlane.xlu0 %2199
  %v2201 = vsel %vm2134, %v2028, 0.0
  %2202 = vadd.xlane.f32.xlu0 %v2201
  %v2203 = vpop.xlane.xlu0 %2202
  %v2204 = vsel %vm2134, %v2029, 0.0
  %2205 = vadd.xlane.f32.xlu0 %v2204
  %v2206 = vpop.xlane.xlu0 %2205
  %v2207 = vsel %vm2134, %v2030, 0.0
  %2208 = vadd.xlane.f32.xlu0 %v2207
  %v2209 = vpop.xlane.xlu0 %2208
  %v2210 = vsel %vm2134, %v2031, 0.0
  %2211 = vadd.xlane.f32.xlu0 %v2210
  %v2212 = vpop.xlane.xlu0 %2211
  %v2213 = vsel %vm2134, %v2032, 0.0
  %2214 = vadd.xlane.f32.xlu0 %v2213
  %v2215 = vpop.xlane.xlu0 %2214
  %v2216 = vsel %vm2134, %v2033, 0.0
  %2217 = vadd.xlane.f32.xlu0 %v2216
  %v2218 = vpop.xlane.xlu0 %2217
  %v2219 = vsel %vm2134, %v2034, 0.0
  %2220 = vadd.xlane.f32.xlu0 %v2219
  %v2221 = vpop.xlane.xlu0 %2220
  %v2222 = vsel %vm2134, %v2035, 0.0
  %2223 = vadd.xlane.f32.xlu0 %v2222
  %v2224 = vpop.xlane.xlu0 %2223
  %v2225 = vsel %vm2134, %v2036, 0.0
  %2226 = vadd.xlane.f32.xlu0 %v2225
  %v2227 = vpop.xlane.xlu0 %2226
  %v2228 = vsel %vm2134, %v2037, 0.0
  %2229 = vadd.xlane.f32.xlu0 %v2228
  %v2230 = vpop.xlane.xlu0 %2229
  %v2231 = vsel %vm2134, %v2038, 0.0
  %2232 = vadd.xlane.f32.xlu0 %v2231
  %v2233 = vpop.xlane.xlu0 %2232
  %v2234 = vsel %vm2134, %v2039, 0.0
  %2235 = vadd.xlane.f32.xlu0 %v2234
  %v2236 = vpop.xlane.xlu0 %2235
  %v2237 = vsel %vm2134, %v2040, 0.0
  %2238 = vadd.xlane.f32.xlu0 %v2237
  %v2239 = vpop.xlane.xlu0 %2238
  %v2240 = vsel %vm2134, %v2041, 0.0
  %2241 = vadd.xlane.f32.xlu0 %v2240
  %v2242 = vpop.xlane.xlu0 %2241
  %v2243 = vsel %vm2134, %v2042, 0.0
  %2244 = vadd.xlane.f32.xlu0 %v2243
  %v2245 = vpop.xlane.xlu0 %2244
  %v2246 = vsel %vm2134, %v2043, 0.0
  %2247 = vadd.xlane.f32.xlu0 %v2246
  %v2248 = vpop.xlane.xlu0 %2247
  %v2249 = vsel %vm2134, %v2044, 0.0
  %2250 = vadd.xlane.f32.xlu0 %v2249
  %v2251 = vpop.xlane.xlu0 %2250
  %v2252 = vsel %vm2134, %v2045, 0.0
  %2253 = vadd.xlane.f32.xlu0 %v2252
  %v2254 = vpop.xlane.xlu0 %2253
  %v2255 = vsel %vm2134, %v2046, 0.0
  %2256 = vadd.xlane.f32.xlu0 %v2255
  %v2257 = vpop.xlane.xlu0 %2256
  %v2258 = vsel %vm2134, %v2047, 0.0
  %2259 = vadd.xlane.f32.xlu0 %v2258
  %v2260 = vpop.xlane.xlu0 %2259
  %v2261 = vsel %vm2134, %v2048, 0.0
  %2262 = vadd.xlane.f32.xlu0 %v2261
  %v2263 = vpop.xlane.xlu0 %2262
  %v2264 = vsel %vm2134, %v2049, 0.0
  %2265 = vadd.xlane.f32.xlu0 %v2264
  %v2266 = vpop.xlane.xlu0 %2265
  %v2267 = vsel %vm2134, %v2050, 0.0
  %2268 = vadd.xlane.f32.xlu0 %v2267
  %v2269 = vpop.xlane.xlu0 %2268
  %v2270 = vsel %vm2134, %v2051, 0.0
  %2271 = vadd.xlane.f32.xlu0 %v2270
  %v2272 = vpop.xlane.xlu0 %2271
  %v2273 = vsel %vm2134, %v2052, 0.0
  %2274 = vadd.xlane.f32.xlu0 %v2273
  %v2275 = vpop.xlane.xlu0 %2274
  %v2276 = vsel %vm2134, %v2053, 0.0
  %2277 = vadd.xlane.f32.xlu0 %v2276
  %v2278 = vpop.xlane.xlu0 %2277
  %v2279 = vsel %vm2134, %v2054, 0.0
  %2280 = vadd.xlane.f32.xlu0 %v2279
  %v2281 = vpop.xlane.xlu0 %2280
  %v2282 = vsel %vm2134, %v2055, 0.0
  %2283 = vadd.xlane.f32.xlu0 %v2282
  %v2284 = vpop.xlane.xlu0 %2283
  %v2285 = vsel %vm2134, %v2056, 0.0
  %2286 = vadd.xlane.f32.xlu0 %v2285
  %v2287 = vpop.xlane.xlu0 %2286
  %v2288 = vsel %vm2134, %v2057, 0.0
  %2289 = vadd.xlane.f32.xlu0 %v2288
  %v2290 = vpop.xlane.xlu0 %2289
  %v2291 = vsel %vm2134, %v2058, 0.0
  %2292 = vadd.xlane.f32.xlu0 %v2291
  %v2293 = vpop.xlane.xlu0 %2292
  %v2294 = vsel %vm2134, %v2059, 0.0
  %2295 = vadd.xlane.f32.xlu0 %v2294
  %v2296 = vpop.xlane.xlu0 %2295
  %v2297 = vsel %vm2134, %v2060, 0.0
  %2298 = vadd.xlane.f32.xlu0 %v2297
  %v2299 = vpop.xlane.xlu0 %2298
  %v2300 = vsel %vm2134, %v2061, 0.0
  %2301 = vadd.xlane.f32.xlu0 %v2300
  %v2302 = vpop.xlane.xlu0 %2301
  %v2303 = vsel %vm2134, %v2062, 0.0
  %2304 = vadd.xlane.f32.xlu0 %v2303
  %v2305 = vpop.xlane.xlu0 %2304
  %v2306 = vsel %vm2134, %v2063, 0.0
  %2307 = vadd.xlane.f32.xlu0 %v2306
  %v2308 = vpop.xlane.xlu0 %2307
  %v2309 = vsel %vm2134, %v2064, 0.0
  %2310 = vadd.xlane.f32.xlu0 %v2309
  %v2311 = vpop.xlane.xlu0 %2310
  %v2312 = vsel %vm2134, %v2065, 0.0
  %2313 = vadd.xlane.f32.xlu0 %v2312
  %v2314 = vpop.xlane.xlu0 %2313
  %v2315 = vsel %vm2134, %v2066, 0.0
  %2316 = vadd.xlane.f32.xlu0 %v2315
  %v2317 = vpop.xlane.xlu0 %2316
  %v2318 = vsel %vm2134, %v2067, 0.0
  %2319 = vadd.xlane.f32.xlu0 %v2318
  %v2320 = vpop.xlane.xlu0 %2319
  %v2321 = vsel %vm2134, %v2068, 0.0
  %2322 = vadd.xlane.f32.xlu0 %v2321
  %v2323 = vpop.xlane.xlu0 %2322
  %v2324 = vsel %vm2134, %v2069, 0.0
  %2325 = vadd.xlane.f32.xlu0 %v2324
  %v2326 = vpop.xlane.xlu0 %2325
  %v2327 = vsel %vm2134, %v2070, 0.0
  %2328 = vadd.xlane.f32.xlu0 %v2327
  %v2329 = vpop.xlane.xlu0 %2328
  %v2330 = vsel %vm2134, %v2071, 0.0
  %2331 = vadd.xlane.f32.xlu0 %v2330
  %v2332 = vpop.xlane.xlu0 %2331
  %v2333 = vsel %vm2134, %v2072, 0.0
  %2334 = vadd.xlane.f32.xlu0 %v2333
  %v2335 = vpop.xlane.xlu0 %2334
  %v2336 = vsel %vm2134, %v2073, 0.0
  %2337 = vadd.xlane.f32.xlu0 %v2336
  %v2338 = vpop.xlane.xlu0 %2337
  %v2339 = vsel %vm2134, %v2074, 0.0
  %2340 = vadd.xlane.f32.xlu0 %v2339
  %v2341 = vpop.xlane.xlu0 %2340
  %v2342 = vsel %vm2134, %v2075, 0.0
  %2343 = vadd.xlane.f32.xlu0 %v2342
  %v2344 = vpop.xlane.xlu0 %2343
  %v2345 = vsel %vm2134, %v2076, 0.0
  %2346 = vadd.xlane.f32.xlu0 %v2345
  %v2347 = vpop.xlane.xlu0 %2346
  %v2348 = vsel %vm2134, %v2077, 0.0
  %2349 = vadd.xlane.f32.xlu0 %v2348
  %v2350 = vpop.xlane.xlu0 %2349
  %v2351 = vsel %vm2134, %v2078, 0.0
  %2352 = vadd.xlane.f32.xlu0 %v2351
  %v2353 = vpop.xlane.xlu0 %2352
  %v2354 = vsel %vm2134, %v2079, 0.0
  %2355 = vadd.xlane.f32.xlu0 %v2354
  %v2356 = vpop.xlane.xlu0 %2355
  %v2357 = vsel %vm2134, %v2080, 0.0
  %2358 = vadd.xlane.f32.xlu0 %v2357
  %v2359 = vpop.xlane.xlu0 %2358
  %v2360 = vsel %vm2134, %v2081, 0.0
  %2361 = vadd.xlane.f32.xlu0 %v2360
  %v2362 = vpop.xlane.xlu0 %2361
  %v2363 = vsel %vm2134, %v2082, 0.0
  %2364 = vadd.xlane.f32.xlu0 %v2363
  %v2365 = vpop.xlane.xlu0 %2364
  %v2366 = vsel %vm2134, %v2083, 0.0
  %2367 = vadd.xlane.f32.xlu0 %v2366
  %v2368 = vpop.xlane.xlu0 %2367
  %v2369 = vsel %vm2134, %v2084, 0.0
  %2370 = vadd.xlane.f32.xlu0 %v2369
  %v2371 = vpop.xlane.xlu0 %2370
  %v2372 = vsel %vm2134, %v2085, 0.0
  %2373 = vadd.xlane.f32.xlu0 %v2372
  %v2374 = vpop.xlane.xlu0 %2373
  %v2375 = vsel %vm2134, %v2086, 0.0
  %2376 = vadd.xlane.f32.xlu0 %v2375
  %v2377 = vpop.xlane.xlu0 %2376
  %v2378 = vsel %vm2134, %v2087, 0.0
  %2379 = vadd.xlane.f32.xlu0 %v2378
  %v2380 = vpop.xlane.xlu0 %2379
  %v2381 = vsel %vm2134, %v2088, 0.0
  %2382 = vadd.xlane.f32.xlu0 %v2381
  %v2383 = vpop.xlane.xlu0 %2382
  %v2384 = vsel %vm2134, %v2089, 0.0
  %2385 = vadd.xlane.f32.xlu0 %v2384
  %v2386 = vpop.xlane.xlu0 %2385
  %v2387 = vsel %vm2134, %v2090, 0.0
  %2388 = vadd.xlane.f32.xlu0 %v2387
  %v2389 = vpop.xlane.xlu0 %2388
  %v2390 = vsel %vm2134, %v2091, 0.0
  %2391 = vadd.xlane.f32.xlu0 %v2390
  %v2392 = vpop.xlane.xlu0 %2391
  %v2393 = vsel %vm2134, %v2092, 0.0
  %2394 = vadd.xlane.f32.xlu0 %v2393
  %v2395 = vpop.xlane.xlu0 %2394
  %v2396 = vsel %vm2134, %v2093, 0.0
  %2397 = vadd.xlane.f32.xlu0 %v2396
  %v2398 = vpop.xlane.xlu0 %2397
  %v2399 = vsel %vm2134, %v2094, 0.0
  %2400 = vadd.xlane.f32.xlu0 %v2399
  %v2401 = vpop.xlane.xlu0 %2400
  %v2402 = vsel %vm2134, %v2095, 0.0
  %2403 = vadd.xlane.f32.xlu0 %v2402
  %v2404 = vpop.xlane.xlu0 %2403
  %v2405 = vsel %vm2134, %v2096, 0.0
  %2406 = vadd.xlane.f32.xlu0 %v2405
  %v2407 = vpop.xlane.xlu0 %2406
  %v2408 = vsel %vm2134, %v2097, 0.0
  %2409 = vadd.xlane.f32.xlu0 %v2408
  %v2410 = vpop.xlane.xlu0 %2409
  %v2411 = vsel %vm2134, %v2098, 0.0
  %2412 = vadd.xlane.f32.xlu0 %v2411
  %v2413 = vpop.xlane.xlu0 %2412
  %v2414 = vsel %vm2134, %v2099, 0.0
  %2415 = vadd.xlane.f32.xlu0 %v2414
  %v2416 = vpop.xlane.xlu0 %2415
  %v2417 = vsel %vm2134, %v2100, 0.0
  %2418 = vadd.xlane.f32.xlu0 %v2417
  %v2419 = vpop.xlane.xlu0 %2418
  %v2420 = vsel %vm2134, %v2101, 0.0
  %2421 = vadd.xlane.f32.xlu0 %v2420
  %v2422 = vpop.xlane.xlu0 %2421
  %v2423 = vsel %vm2134, %v2102, 0.0
  %2424 = vadd.xlane.f32.xlu0 %v2423
  %v2425 = vpop.xlane.xlu0 %2424
  %v2426 = vsel %vm2134, %v2103, 0.0
  %2427 = vadd.xlane.f32.xlu0 %v2426
  %v2428 = vpop.xlane.xlu0 %2427
  %v2429 = vsel %vm2134, %v2104, 0.0
  %2430 = vadd.xlane.f32.xlu0 %v2429
  %v2431 = vpop.xlane.xlu0 %2430
  %v2432 = vsel %vm2134, %v2105, 0.0
  %2433 = vadd.xlane.f32.xlu0 %v2432
  %v2434 = vpop.xlane.xlu0 %2433
  %v2435 = vsel %vm2134, %v2106, 0.0
  %2436 = vadd.xlane.f32.xlu0 %v2435
  %v2437 = vpop.xlane.xlu0 %2436
  %v2438 = vsel %vm2134, %v2107, 0.0
  %2439 = vadd.xlane.f32.xlu0 %v2438
  %v2440 = vpop.xlane.xlu0 %2439
  %v2441 = vsel %vm2134, %v2108, 0.0
  %2442 = vadd.xlane.f32.xlu0 %v2441
  %v2443 = vpop.xlane.xlu0 %2442
  %v2444 = vsel %vm2134, %v2109, 0.0
  %2445 = vadd.xlane.f32.xlu0 %v2444
  %v2446 = vpop.xlane.xlu0 %2445
  %v2447 = vsel %vm2134, %v2110, 0.0
  %2448 = vadd.xlane.f32.xlu0 %v2447
  %v2449 = vpop.xlane.xlu0 %2448
  %v2450 = vsel %vm2134, %v2111, 0.0
  %2451 = vadd.xlane.f32.xlu0 %v2450
  %v2452 = vpop.xlane.xlu0 %2451
  %v2453 = vsel %vm2134, %v2112, 0.0
  %2454 = vadd.xlane.f32.xlu0 %v2453
  %v2455 = vpop.xlane.xlu0 %2454
  %v2456 = vsel %vm2134, %v2113, 0.0
  %2457 = vadd.xlane.f32.xlu0 %v2456
  %v2458 = vpop.xlane.xlu0 %2457
  %v2459 = vsel %vm2134, %v2114, 0.0
  %2460 = vadd.xlane.f32.xlu0 %v2459
  %v2461 = vpop.xlane.xlu0 %2460
  %v2462 = vsel %vm2134, %v2115, 0.0
  %2463 = vadd.xlane.f32.xlu0 %v2462
  %v2464 = vpop.xlane.xlu0 %2463
  %v2465 = vsel %vm2134, %v2116, 0.0
  %2466 = vadd.xlane.f32.xlu0 %v2465
  %v2467 = vpop.xlane.xlu0 %2466
  %v2468 = vsel %vm2134, %v2117, 0.0
  %2469 = vadd.xlane.f32.xlu0 %v2468
  %v2470 = vpop.xlane.xlu0 %2469
  %v2471 = vsel %vm2134, %v2118, 0.0
  %2472 = vadd.xlane.f32.xlu0 %v2471
  %v2473 = vpop.xlane.xlu0 %2472
  %v2474 = vsel %vm2134, %v2119, 0.0
  %2475 = vadd.xlane.f32.xlu0 %v2474
  %v2476 = vpop.xlane.xlu0 %2475
  %v2477 = vsel %vm2134, %v2120, 0.0
  %2478 = vadd.xlane.f32.xlu0 %v2477
  %v2479 = vpop.xlane.xlu0 %2478
  %v2480 = vsel %vm2134, %v2121, 0.0
  %2481 = vadd.xlane.f32.xlu0 %v2480
  %v2482 = vpop.xlane.xlu0 %2481
  %v2483 = vsel %vm2134, %v2122, 0.0
  %2484 = vadd.xlane.f32.xlu0 %v2483
  %v2485 = vpop.xlane.xlu0 %2484
  %v2486 = vsel %vm2134, %v2123, 0.0
  %2487 = vadd.xlane.f32.xlu0 %v2486
  %v2488 = vpop.xlane.xlu0 %2487
  %v2489 = vsel %vm2134, %v2124, 0.0
  %2490 = vadd.xlane.f32.xlu0 %v2489
  %v2491 = vpop.xlane.xlu0 %2490
  %v2492 = vsel %vm2134, %v2125, 0.0
  %2493 = vadd.xlane.f32.xlu0 %v2492
  %v2494 = vpop.xlane.xlu0 %2493
  %v2495 = vsel %vm2134, %v2126, 0.0
  %2496 = vadd.xlane.f32.xlu0 %v2495
  %v2497 = vpop.xlane.xlu0 %2496
  %v2498 = vsel %vm2134, %v2127, 0.0
  %2499 = vadd.xlane.f32.xlu0 %v2498
  %v2500 = vpop.xlane.xlu0 %2499
  %v2501 = vsel %vm2134, %v2128, 0.0
  %2502 = vadd.xlane.f32.xlu0 %v2501
  %v2503 = vpop.xlane.xlu0 %2502
  %v2504 = vsel %vm2134, %v2129, 0.0
  %2505 = vadd.xlane.f32.xlu0 %v2504
  %v2506 = vpop.xlane.xlu0 %2505
  %v2507 = vsel %vm2134, %v2130, 0.0
  %2508 = vadd.xlane.f32.xlu0 %v2507
  %v2509 = vpop.xlane.xlu0 %2508
  %v2510 = vsel %vm2134, %v2131, 0.0
  %2511 = vadd.xlane.f32.xlu0 %v2510
  %v2512 = vpop.xlane.xlu0 %2511
  %v2513 = vsel %vm2134, %v2132, 0.0
  %2514 = vadd.xlane.f32.xlu0 %v2513
  %v2515 = vpop.xlane.xlu0 %2514
  %v2516 = vsel %vm2134, %v2133, 0.0
  %2517 = vadd.xlane.f32.xlu0 %v2516
  %v2518 = vpop.xlane.xlu0 %2517
  %v2519 = vld [vmem:[#allocation2] sm:$0x1]
  %v2521 = vperm.slane %v2519, 0
  %2522 = vset.pattern.permute.xlu0 0
  %2523 = vperm.xlu0 %2522, %v2521
  %v2524 = vpop.permute.xlu0 %2523
  %v2526 = vadd.f32 %v2137, %v2524
  %v2527 = vadd.f32 %v2140, %v2524
  %v2528 = vadd.f32 %v2143, %v2524
  %v2529 = vadd.f32 %v2146, %v2524
  %v2530 = vadd.f32 %v2149, %v2524
  %v2531 = vadd.f32 %v2152, %v2524
  %v2532 = vadd.f32 %v2155, %v2524
  %v2533 = vadd.f32 %v2158, %v2524
  %v2534 = vadd.f32 %v2161, %v2524
  %v2535 = vadd.f32 %v2164, %v2524
  %v2536 = vadd.f32 %v2167, %v2524
  %v2537 = vadd.f32 %v2170, %v2524
  %v2538 = vadd.f32 %v2173, %v2524
  %v2539 = vadd.f32 %v2176, %v2524
  %v2540 = vadd.f32 %v2179, %v2524
  %v2541 = vadd.f32 %v2182, %v2524
  %v2542 = vadd.f32 %v2185, %v2524
  %v2543 = vadd.f32 %v2188, %v2524
  %v2544 = vadd.f32 %v2191, %v2524
  %v2545 = vadd.f32 %v2194, %v2524
  %v2546 = vadd.f32 %v2197, %v2524
  %v2547 = vadd.f32 %v2200, %v2524
  %v2548 = vadd.f32 %v2203, %v2524
  %v2549 = vadd.f32 %v2206, %v2524
  %v2550 = vadd.f32 %v2209, %v2524
  %v2551 = vadd.f32 %v2212, %v2524
  %v2552 = vadd.f32 %v2215, %v2524
  %v2553 = vadd.f32 %v2218, %v2524
  %v2554 = vadd.f32 %v2221, %v2524
  %v2555 = vadd.f32 %v2224, %v2524
  %v2556 = vadd.f32 %v2227, %v2524
  %v2557 = vadd.f32 %v2230, %v2524
  %v2558 = vadd.f32 %v2233, %v2524
  %v2559 = vadd.f32 %v2236, %v2524
  %v2560 = vadd.f32 %v2239, %v2524
  %v2561 = vadd.f32 %v2242, %v2524
  %v2562 = vadd.f32 %v2245, %v2524
  %v2563 = vadd.f32 %v2248, %v2524
  %v2564 = vadd.f32 %v2251, %v2524
  %v2565 = vadd.f32 %v2254, %v2524
  %v2566 = vadd.f32 %v2257, %v2524
  %v2567 = vadd.f32 %v2260, %v2524
  %v2568 = vadd.f32 %v2263, %v2524
  %v2569 = vadd.f32 %v2266, %v2524
  %v2570 = vadd.f32 %v2269, %v2524
  %v2571 = vadd.f32 %v2272, %v2524
  %v2572 = vadd.f32 %v2275, %v2524
  %v2573 = vadd.f32 %v2278, %v2524
  %v2574 = vadd.f32 %v2281, %v2524
  %v2575 = vadd.f32 %v2284, %v2524
  %v2576 = vadd.f32 %v2287, %v2524
  %v2577 = vadd.f32 %v2290, %v2524
  %v2578 = vadd.f32 %v2293, %v2524
  %v2579 = vadd.f32 %v2296, %v2524
  %v2580 = vadd.f32 %v2299, %v2524
  %v2581 = vadd.f32 %v2302, %v2524
  %v2582 = vadd.f32 %v2305, %v2524
  %v2583 = vadd.f32 %v2308, %v2524
  %v2584 = vadd.f32 %v2311, %v2524
  %v2585 = vadd.f32 %v2314, %v2524
  %v2586 = vadd.f32 %v2317, %v2524
  %v2587 = vadd.f32 %v2320, %v2524
  %v2588 = vadd.f32 %v2323, %v2524
  %v2589 = vadd.f32 %v2326, %v2524
  %v2590 = vadd.f32 %v2329, %v2524
  %v2591 = vadd.f32 %v2332, %v2524
  %v2592 = vadd.f32 %v2335, %v2524
  %v2593 = vadd.f32 %v2338, %v2524
  %v2594 = vadd.f32 %v2341, %v2524
  %v2595 = vadd.f32 %v2344, %v2524
  %v2596 = vadd.f32 %v2347, %v2524
  %v2597 = vadd.f32 %v2350, %v2524
  %v2598 = vadd.f32 %v2353, %v2524
  %v2599 = vadd.f32 %v2356, %v2524
  %v2600 = vadd.f32 %v2359, %v2524
  %v2601 = vadd.f32 %v2362, %v2524
  %v2602 = vadd.f32 %v2365, %v2524
  %v2603 = vadd.f32 %v2368, %v2524
  %v2604 = vadd.f32 %v2371, %v2524
  %v2605 = vadd.f32 %v2374, %v2524
  %v2606 = vadd.f32 %v2377, %v2524
  %v2607 = vadd.f32 %v2380, %v2524
  %v2608 = vadd.f32 %v2383, %v2524
  %v2609 = vadd.f32 %v2386, %v2524
  %v2610 = vadd.f32 %v2389, %v2524
  %v2611 = vadd.f32 %v2392, %v2524
  %v2612 = vadd.f32 %v2395, %v2524
  %v2613 = vadd.f32 %v2398, %v2524
  %v2614 = vadd.f32 %v2401, %v2524
  %v2615 = vadd.f32 %v2404, %v2524
  %v2616 = vadd.f32 %v2407, %v2524
  %v2617 = vadd.f32 %v2410, %v2524
  %v2618 = vadd.f32 %v2413, %v2524
  %v2619 = vadd.f32 %v2416, %v2524
  %v2620 = vadd.f32 %v2419, %v2524
  %v2621 = vadd.f32 %v2422, %v2524
  %v2622 = vadd.f32 %v2425, %v2524
  %v2623 = vadd.f32 %v2428, %v2524
  %v2624 = vadd.f32 %v2431, %v2524
  %v2625 = vadd.f32 %v2434, %v2524
  %v2626 = vadd.f32 %v2437, %v2524
  %v2627 = vadd.f32 %v2440, %v2524
  %v2628 = vadd.f32 %v2443, %v2524
  %v2629 = vadd.f32 %v2446, %v2524
  %v2630 = vadd.f32 %v2449, %v2524
  %v2631 = vadd.f32 %v2452, %v2524
  %v2632 = vadd.f32 %v2455, %v2524
  %v2633 = vadd.f32 %v2458, %v2524
  %v2634 = vadd.f32 %v2461, %v2524
  %v2635 = vadd.f32 %v2464, %v2524
  %v2636 = vadd.f32 %v2467, %v2524
  %v2637 = vadd.f32 %v2470, %v2524
  %v2638 = vadd.f32 %v2473, %v2524
  %v2639 = vadd.f32 %v2476, %v2524
  %v2640 = vadd.f32 %v2479, %v2524
  %v2641 = vadd.f32 %v2482, %v2524
  %v2642 = vadd.f32 %v2485, %v2524
  %v2643 = vadd.f32 %v2488, %v2524
  %v2644 = vadd.f32 %v2491, %v2524
  %v2645 = vadd.f32 %v2494, %v2524
  %v2646 = vadd.f32 %v2497, %v2524
  %v2647 = vadd.f32 %v2500, %v2524
  %v2648 = vadd.f32 %v2503, %v2524
  %v2649 = vadd.f32 %v2506, %v2524
  %v2650 = vadd.f32 %v2509, %v2524
  %v2651 = vadd.f32 %v2512, %v2524
  %v2652 = vadd.f32 %v2515, %v2524
  %v2653 = vadd.f32 %v2518, %v2524
  %v2782 = vlaneseq
  %v2783 = vand.u32 %v2782, 127
  %v2784 = vperm.slane %v2526, %v2783
  %v2785 = vadd.s32 %v2783, 4294967288
  %v2786 = vperm.slane %v2527, %v2785
  %vm2787 = vcmask 130112
  %v2788 = vsel %vm2787, %v2786, %v2784
  %v2789 = vadd.s32 %v2783, 4294967280
  %v2790 = vperm.slane %v2528, %v2789
  %vm2791 = vcmask 195712
  %v2792 = vsel %vm2791, %v2790, %v2788
  %v2793 = vadd.s32 %v2783, 4294967272
  %v2794 = vperm.slane %v2529, %v2793
  %vm2795 = vcmask 261312
  %v2796 = vsel %vm2795, %v2794, %v2792
  %v2797 = vadd.s32 %v2783, 4294967264
  %v2798 = vperm.slane %v2530, %v2797
  %vm2799 = vcmask 326912
  %v2800 = vsel %vm2799, %v2798, %v2796
  %v2801 = vadd.s32 %v2783, 4294967256
  %v2802 = vperm.slane %v2531, %v2801
  %vm2803 = vcmask 392512
  %v2804 = vsel %vm2803, %v2802, %v2800
  %v2805 = vadd.s32 %v2783, 4294967248
  %v2806 = vperm.slane %v2532, %v2805
  %vm2807 = vcmask 458112
  %v2808 = vsel %vm2807, %v2806, %v2804
  %v2809 = vadd.s32 %v2783, 4294967240
  %v2810 = vperm.slane %v2533, %v2809
  %vm2811 = vcmask 523712
  %v2812 = vsel %vm2811, %v2810, %v2808
  %v2813 = vadd.s32 %v2783, 4294967232
  %v2814 = vperm.slane %v2534, %v2813
  %vm2815 = vcmask 589312
  %v2816 = vsel %vm2815, %v2814, %v2812
  %v2817 = vadd.s32 %v2783, 4294967224
  %v2818 = vperm.slane %v2535, %v2817
  %vm2819 = vcmask 654912
  %v2820 = vsel %vm2819, %v2818, %v2816
  %v2821 = vadd.s32 %v2783, 4294967216
  %v2822 = vperm.slane %v2536, %v2821
  %vm2823 = vcmask 720512
  %v2824 = vsel %vm2823, %v2822, %v2820
  %v2825 = vadd.s32 %v2783, 4294967208
  %v2826 = vperm.slane %v2537, %v2825
  %vm2827 = vcmask 786112
  %v2828 = vsel %vm2827, %v2826, %v2824
  %v2829 = vadd.s32 %v2783, 4294967200
  %v2830 = vperm.slane %v2538, %v2829
  %vm2831 = vcmask 851712
  %v2832 = vsel %vm2831, %v2830, %v2828
  %v2833 = vadd.s32 %v2783, 4294967192
  %v2834 = vperm.slane %v2539, %v2833
  %vm2835 = vcmask 917312
  %v2836 = vsel %vm2835, %v2834, %v2832
  %v2837 = vadd.s32 %v2783, 4294967184
  %v2838 = vperm.slane %v2540, %v2837
  %vm2839 = vcmask 982912
  %v2840 = vsel %vm2839, %v2838, %v2836
  %v2841 = vadd.s32 %v2783, 4294967176
  %v2842 = vperm.slane %v2541, %v2841
  %vm2843 = vcmask 1048512
  %v2844 = vsel %vm2843, %v2842, %v2840
  %v2845 = vperm.slane %v2542, %v2783
  %v2846 = vperm.slane %v2543, %v2785
  %v2847 = vsel %vm2787, %v2846, %v2845
  %v2848 = vperm.slane %v2544, %v2789
  %v2849 = vsel %vm2791, %v2848, %v2847
  %v2850 = vperm.slane %v2545, %v2793
  %v2851 = vsel %vm2795, %v2850, %v2849
  %v2852 = vperm.slane %v2546, %v2797
  %v2853 = vsel %vm2799, %v2852, %v2851
  %v2854 = vperm.slane %v2547, %v2801
  %v2855 = vsel %vm2803, %v2854, %v2853
  %v2856 = vperm.slane %v2548, %v2805
  %v2857 = vsel %vm2807, %v2856, %v2855
  %v2858 = vperm.slane %v2549, %v2809
  %v2859 = vsel %vm2811, %v2858, %v2857
  %v2860 = vperm.slane %v2550, %v2813
  %v2861 = vsel %vm2815, %v2860, %v2859
  %v2862 = vperm.slane %v2551, %v2817
  %v2863 = vsel %vm2819, %v2862, %v2861
  %v2864 = vperm.slane %v2552, %v2821
  %v2865 = vsel %vm2823, %v2864, %v2863
  %v2866 = vperm.slane %v2553, %v2825
  %v2867 = vsel %vm2827, %v2866, %v2865
  %v2868 = vperm.slane %v2554, %v2829
  %v2869 = vsel %vm2831, %v2868, %v2867
  %v2870 = vperm.slane %v2555, %v2833
  %v2871 = vsel %vm2835, %v2870, %v2869
  %v2872 = vperm.slane %v2556, %v2837
  %v2873 = vsel %vm2839, %v2872, %v2871
  %v2874 = vperm.slane %v2557, %v2841
  %v2875 = vsel %vm2843, %v2874, %v2873
  %v2876 = vperm.slane %v2558, %v2783
  %v2877 = vperm.slane %v2559, %v2785
  %v2878 = vsel %vm2787, %v2877, %v2876
  %v2879 = vperm.slane %v2560, %v2789
  %v2880 = vsel %vm2791, %v2879, %v2878
  %v2881 = vperm.slane %v2561, %v2793
  %v2882 = vsel %vm2795, %v2881, %v2880
  %v2883 = vperm.slane %v2562, %v2797
  %v2884 = vsel %vm2799, %v2883, %v2882
  %v2885 = vperm.slane %v2563, %v2801
  %v2886 = vsel %vm2803, %v2885, %v2884
  %v2887 = vperm.slane %v2564, %v2805
  %v2888 = vsel %vm2807, %v2887, %v2886
  %v2889 = vperm.slane %v2565, %v2809
  %v2890 = vsel %vm2811, %v2889, %v2888
  %v2891 = vperm.slane %v2566, %v2813
  %v2892 = vsel %vm2815, %v2891, %v2890
  %v2893 = vperm.slane %v2567, %v2817
  %v2894 = vsel %vm2819, %v2893, %v2892
  %v2895 = vperm.slane %v2568, %v2821
  %v2896 = vsel %vm2823, %v2895, %v2894
  %v2897 = vperm.slane %v2569, %v2825
  %v2898 = vsel %vm2827, %v2897, %v2896
  %v2899 = vperm.slane %v2570, %v2829
  %v2900 = vsel %vm2831, %v2899, %v2898
  %v2901 = vperm.slane %v2571, %v2833
  %v2902 = vsel %vm2835, %v2901, %v2900
  %v2903 = vperm.slane %v2572, %v2837
  %v2904 = vsel %vm2839, %v2903, %v2902
  %v2905 = vperm.slane %v2573, %v2841
  %v2906 = vsel %vm2843, %v2905, %v2904
  %v2907 = vperm.slane %v2574, %v2783
  %v2908 = vperm.slane %v2575, %v2785
  %v2909 = vsel %vm2787, %v2908, %v2907
  %v2910 = vperm.slane %v2576, %v2789
  %v2911 = vsel %vm2791, %v2910, %v2909
  %v2912 = vperm.slane %v2577, %v2793
  %v2913 = vsel %vm2795, %v2912, %v2911
  %v2914 = vperm.slane %v2578, %v2797
  %v2915 = vsel %vm2799, %v2914, %v2913
  %v2916 = vperm.slane %v2579, %v2801
  %v2917 = vsel %vm2803, %v2916, %v2915
  %v2918 = vperm.slane %v2580, %v2805
  %v2919 = vsel %vm2807, %v2918, %v2917
  %v2920 = vperm.slane %v2581, %v2809
  %v2921 = vsel %vm2811, %v2920, %v2919
  %v2922 = vperm.slane %v2582, %v2813
  %v2923 = vsel %vm2815, %v2922, %v2921
  %v2924 = vperm.slane %v2583, %v2817
  %v2925 = vsel %vm2819, %v2924, %v2923
  %v2926 = vperm.slane %v2584, %v2821
  %v2927 = vsel %vm2823, %v2926, %v2925
  %v2928 = vperm.slane %v2585, %v2825
  %v2929 = vsel %vm2827, %v2928, %v2927
  %v2930 = vperm.slane %v2586, %v2829
  %v2931 = vsel %vm2831, %v2930, %v2929
  %v2932 = vperm.slane %v2587, %v2833
  %v2933 = vsel %vm2835, %v2932, %v2931
  %v2934 = vperm.slane %v2588, %v2837
  %v2935 = vsel %vm2839, %v2934, %v2933
  %v2936 = vperm.slane %v2589, %v2841
  %v2937 = vsel %vm2843, %v2936, %v2935
  %v2938 = vperm.slane %v2590, %v2783
  %v2939 = vperm.slane %v2591, %v2785
  %v2940 = vsel %vm2787, %v2939, %v2938
  %v2941 = vperm.slane %v2592, %v2789
  %v2942 = vsel %vm2791, %v2941, %v2940
  %v2943 = vperm.slane %v2593, %v2793
  %v2944 = vsel %vm2795, %v2943, %v2942
  %v2945 = vperm.slane %v2594, %v2797
  %v2946 = vsel %vm2799, %v2945, %v2944
  %v2947 = vperm.slane %v2595, %v2801
  %v2948 = vsel %vm2803, %v2947, %v2946
  %v2949 = vperm.slane %v2596, %v2805
  %v2950 = vsel %vm2807, %v2949, %v2948
  %v2951 = vperm.slane %v2597, %v2809
  %v2952 = vsel %vm2811, %v2951, %v2950
  %v2953 = vperm.slane %v2598, %v2813
  %v2954 = vsel %vm2815, %v2953, %v2952
  %v2955 = vperm.slane %v2599, %v2817
  %v2956 = vsel %vm2819, %v2955, %v2954
  %v2957 = vperm.slane %v2600, %v2821
  %v2958 = vsel %vm2823, %v2957, %v2956
  %v2959 = vperm.slane %v2601, %v2825
  %v2960 = vsel %vm2827, %v2959, %v2958
  %v2961 = vperm.slane %v2602, %v2829
  %v2962 = vsel %vm2831, %v2961, %v2960
  %v2963 = vperm.slane %v2603, %v2833
  %v2964 = vsel %vm2835, %v2963, %v2962
  %v2965 = vperm.slane %v2604, %v2837
  %v2966 = vsel %vm2839, %v2965, %v2964
  %v2967 = vperm.slane %v2605, %v2841
  %v2968 = vsel %vm2843, %v2967, %v2966
  %v2969 = vperm.slane %v2606, %v2783
  %v2970 = vperm.slane %v2607, %v2785
  %v2971 = vsel %vm2787, %v2970, %v2969
  %v2972 = vperm.slane %v2608, %v2789
  %v2973 = vsel %vm2791, %v2972, %v2971
  %v2974 = vperm.slane %v2609, %v2793
  %v2975 = vsel %vm2795, %v2974, %v2973
  %v2976 = vperm.slane %v2610, %v2797
  %v2977 = vsel %vm2799, %v2976, %v2975
  %v2978 = vperm.slane %v2611, %v2801
  %v2979 = vsel %vm2803, %v2978, %v2977
  %v2980 = vperm.slane %v2612, %v2805
  %v2981 = vsel %vm2807, %v2980, %v2979
  %v2982 = vperm.slane %v2613, %v2809
  %v2983 = vsel %vm2811, %v2982, %v2981
  %v2984 = vperm.slane %v2614, %v2813
  %v2985 = vsel %vm2815, %v2984, %v2983
  %v2986 = vperm.slane %v2615, %v2817
  %v2987 = vsel %vm2819, %v2986, %v2985
  %v2988 = vperm.slane %v2616, %v2821
  %v2989 = vsel %vm2823, %v2988, %v2987
  %v2990 = vperm.slane %v2617, %v2825
  %v2991 = vsel %vm2827, %v2990, %v2989
  %v2992 = vperm.slane %v2618, %v2829
  %v2993 = vsel %vm2831, %v2992, %v2991
  %v2994 = vperm.slane %v2619, %v2833
  %v2995 = vsel %vm2835, %v2994, %v2993
  %v2996 = vperm.slane %v2620, %v2837
  %v2997 = vsel %vm2839, %v2996, %v2995
  %v2998 = vperm.slane %v2621, %v2841
  %v2999 = vsel %vm2843, %v2998, %v2997
  %v3000 = vperm.slane %v2622, %v2783
  %v3001 = vperm.slane %v2623, %v2785
  %v3002 = vsel %vm2787, %v3001, %v3000
  %v3003 = vperm.slane %v2624, %v2789
  %v3004 = vsel %vm2791, %v3003, %v3002
  %v3005 = vperm.slane %v2625, %v2793
  %v3006 = vsel %vm2795, %v3005, %v3004
  %v3007 = vperm.slane %v2626, %v2797
  %v3008 = vsel %vm2799, %v3007, %v3006
  %v3009 = vperm.slane %v2627, %v2801
  %v3010 = vsel %vm2803, %v3009, %v3008
  %v3011 = vperm.slane %v2628, %v2805
  %v3012 = vsel %vm2807, %v3011, %v3010
  %v3013 = vperm.slane %v2629, %v2809
  %v3014 = vsel %vm2811, %v3013, %v3012
  %v3015 = vperm.slane %v2630, %v2813
  %v3016 = vsel %vm2815, %v3015, %v3014
  %v3017 = vperm.slane %v2631, %v2817
  %v3018 = vsel %vm2819, %v3017, %v3016
  %v3019 = vperm.slane %v2632, %v2821
  %v3020 = vsel %vm2823, %v3019, %v3018
  %v3021 = vperm.slane %v2633, %v2825
  %v3022 = vsel %vm2827, %v3021, %v3020
  %v3023 = vperm.slane %v2634, %v2829
  %v3024 = vsel %vm2831, %v3023, %v3022
  %v3025 = vperm.slane %v2635, %v2833
  %v3026 = vsel %vm2835, %v3025, %v3024
  %v3027 = vperm.slane %v2636, %v2837
  %v3028 = vsel %vm2839, %v3027, %v3026
  %v3029 = vperm.slane %v2637, %v2841
  %v3030 = vsel %vm2843, %v3029, %v3028
  %v3031 = vperm.slane %v2638, %v2783
  %v3032 = vperm.slane %v2639, %v2785
  %v3033 = vsel %vm2787, %v3032, %v3031
  %v3034 = vperm.slane %v2640, %v2789
  %v3035 = vsel %vm2791, %v3034, %v3033
  %v3036 = vperm.slane %v2641, %v2793
  %v3037 = vsel %vm2795, %v3036, %v3035
  %v3038 = vperm.slane %v2642, %v2797
  %v3039 = vsel %vm2799, %v3038, %v3037
  %v3040 = vperm.slane %v2643, %v2801
  %v3041 = vsel %vm2803, %v3040, %v3039
  %v3042 = vperm.slane %v2644, %v2805
  %v3043 = vsel %vm2807, %v3042, %v3041
  %v3044 = vperm.slane %v2645, %v2809
  %v3045 = vsel %vm2811, %v3044, %v3043
  %v3046 = vperm.slane %v2646, %v2813
  %v3047 = vsel %vm2815, %v3046, %v3045
  %v3048 = vperm.slane %v2647, %v2817
  %v3049 = vsel %vm2819, %v3048, %v3047
  %v3050 = vperm.slane %v2648, %v2821
  %v3051 = vsel %vm2823, %v3050, %v3049
  %v3052 = vperm.slane %v2649, %v2825
  %v3053 = vsel %vm2827, %v3052, %v3051
  %v3054 = vperm.slane %v2650, %v2829
  %v3055 = vsel %vm2831, %v3054, %v3053
  %v3056 = vperm.slane %v2651, %v2833
  %v3057 = vsel %vm2835, %v3056, %v3055
  %v3058 = vperm.slane %v2652, %v2837
  %v3059 = vsel %vm2839, %v3058, %v3057
  %v3060 = vperm.slane %v2653, %v2841
  %v3061 = vsel %vm2843, %v3060, %v3059
  %vm3062 = vcmask 1041409
  %v3063 = vsel %vm3062, %v2875, %v2844
  %vm3064 = vcmask 1042434
  %v3065 = vsel %vm3064, %v2906, %v3063
  %vm3066 = vcmask 1043459
  %v3067 = vsel %vm3066, %v2937, %v3065
  %vm3068 = vcmask 1044484
  %v3069 = vsel %vm3068, %v2968, %v3067
  %vm3070 = vcmask 1045509
  %v3071 = vsel %vm3070, %v2999, %v3069
  %vm3072 = vcmask 1046534
  %v3073 = vsel %vm3072, %v3030, %v3071
  %vm3074 = vcmask 1047559
  %v3075 = vsel %vm3074, %v3061, %v3073
  %3077 = vst [vmem:[%s7] sm:$0xff] %v3075
  // Predicated region
  $region30: #{regression_model_forward.1} parent=0 // pred_check
    _
  $region31: #{regression_model_forward.1} parent=0 // pred_check_branch
    %3079 = sbr.rel (0) target = $region33
  $region32: #{regression_model_forward.1} parent=0 // pred_region
    _
  $region33: #{regression_model_forward.1} parent=0 // pred_fallthru
    _
  // Predicated region
  $region34: #{regression_model_forward.1} parent=0 // pred_check
    _
  $region35: #{regression_model_forward.1} parent=0 // pred_check_branch
    %3081 = sbr.rel (0) target = $region37
  $region36: #{regression_model_forward.1} parent=0 // pred_region
    _
  $region37: #{regression_model_forward.1} parent=0 // pred_fallthru
    _

</llo_original>
